<compile_context>
chip_gen: v6e
topology: v6e:2x2x1
jax: 0.10.0
libtpu: 0.0.40
codegen_flags: <defaults>
</compile_context>

<pallas_src>
import functools

import jax
import jax.numpy as jnp
from jax.experimental import pallas as pl
from jax.experimental.pallas import tpu as pltpu


def mlp_kernel(x_ref, w1_ref, w2_ref, w3_ref, bp_ref, o_ref):
    H1, H2, H3 = w1_ref.shape[1], w2_ref.shape[1], w3_ref.shape[1]

    # Packed small parameters: row 0 = b1, row 1 = b2, row 2 = b3, row 3 = wp.
    bp = bp_ref[...]
    b1 = bp[0:1, :H1]
    b2 = bp[1:2, :H2]
    b3 = bp[2:3, :H3]
    wp = bp[3:4, :H3]

    # Hidden layer 1: [t, 32] @ [32, 64] + b1, ReLU  (f32 accumulation).
    h = jnp.dot(x_ref[...], w1_ref[...], preferred_element_type=jnp.float32)
    h = jnp.maximum(h + b1, 0.0)
    # Hidden layer 2: [t, 64] @ [64, 64] + b2, ReLU.
    h = jnp.dot(h, w2_ref[...], preferred_element_type=jnp.float32)
    h = jnp.maximum(h + b2, 0.0)
    # Hidden layer 3: [t, 64] @ [64, 32] + b3, ReLU.
    h = jnp.dot(h, w3_ref[...], preferred_element_type=jnp.float32)
    h = jnp.maximum(h + b3, 0.0)
    # Predict layer (no bias): contract wp [1, 32] against h's feature axis ->
    # logits come out lane-major [1, t], so the output store is lane-dense.
    logits = jax.lax.dot_general(
        wp, h,
        dimension_numbers=(((1,), (1,)), ((), ())),
        preferred_element_type=jnp.float32)
    o_ref[...] = jax.nn.sigmoid(logits)


def _round_up(n, m):
    return (n + m - 1) // m * m


def _pick_tile(batch, cap):
    """Return (tile_rows, n_tiles, padded_batch)."""
    if batch <= cap:
        # Single full-batch block: block shape equals the array shape, so no
        # (8,128) divisibility constraint, no padding, grid=(1,).
        return batch, 1, batch
    cap = cap - cap % 8
    # Prefer a tile (multiple of 8 for f32 sublanes) that divides B exactly so
    # we never materialize a padded copy of x.
    for t in range(cap, 7, -8):
        if batch % t == 0:
            return t, batch // t, batch
    padded = _round_up(batch, cap)
    return cap, padded // cap, padded


def prepare_params(w1, b1, w2, b2, w3, b3, wp):
    """One-time (outside the hot path) parameter packing / dtype normalization."""
    H1, H2, H3 = w1.shape[1], w2.shape[1], w3.shape[1]
    width = max(H1, H2, H3)

    def row(v):
        v = jnp.asarray(v, jnp.float32).reshape(-1)
        return jnp.pad(v, (0, width - v.shape[0]))

    bias_pack = jnp.stack([row(b1), row(b2), row(b3), row(wp)], axis=0)  # (4, width)
    return (jnp.asarray(w1, jnp.float32), jnp.asarray(w2, jnp.float32),
            jnp.asarray(w3, jnp.float32), bias_pack)


@functools.partial(jax.jit, static_argnames=("tile_b",))
def mlp_forward(x, w1, w2, w3, bias_pack, *, tile_b=2048):
    B, F = x.shape
    H1, H2, H3 = w1.shape[1], w2.shape[1], w3.shape[1]

    t, n_tiles, B_pad = _pick_tile(B, tile_b)
    if B_pad != B:  # only for ragged batches larger than tile_b with no divisor
        x = jnp.pad(x, ((0, B_pad - B), (0, 0)))

    flops = 2 * B_pad * (F * H1 + H1 * H2 + H2 * H3 + H3)
    bytes_accessed = (
        B_pad * F * 4
        + (w1.size + w2.size + w3.size + bias_pack.size) * 4
        + B_pad * 4)
    cost = pl.CostEstimate(flops=flops, transcendentals=B_pad,
                           bytes_accessed=bytes_accessed)

    full = lambda shape: pl.BlockSpec(shape, lambda i: (0, 0))

    out = pl.pallas_call(
        mlp_kernel,
        out_shape=jax.ShapeDtypeStruct((n_tiles, 1, t), jnp.float32),
        grid_spec=pltpu.PrefetchScalarGridSpec(
            num_scalar_prefetch=0,
            grid=(n_tiles,),
            in_specs=[
                pl.BlockSpec((t, F), lambda i: (i, 0)),     # x row-tile
                full((F, H1)),                              # w1 (VMEM-resident)
                full((H1, H2)),                             # w2
                full((H2, H3)),                             # w3
                full(bias_pack.shape),                      # packed b1/b2/b3/wp
            ],
            # Lane-dense output: one [1, t] row per grid step (leading axis
            # squeezed inside the kernel).
            out_specs=pl.BlockSpec((None, 1, t), lambda i: (i, 0, 0)),
        ),
        compiler_params=pltpu.CompilerParams(
            dimension_semantics=(
                ("parallel",) if n_tiles > 1 else ("arbitrary",))),
        cost_estimate=cost,
    )(x, w1, w2, w3, bias_pack)

    # (n_tiles, 1, t) -> (B,) — the .squeeze(-1) of the PyTorch forward + unpad.
    return out.reshape(B_pad)[:B]


def xavier_normal(key, in_dim, out_dim):
    # torch.nn.init.xavier_normal_: std = sqrt(2 / (fan_in + fan_out))
    std = (2.0 / (in_dim + out_dim)) ** 0.5
    return std * jax.random.normal(key, (in_dim, out_dim), dtype=jnp.float32)


def reference_forward(x, w1, b1, w2, b2, w3, b3, wp):
    # Pure-JAX f32 reference (eval-mode dropout == identity).
    h = jnp.maximum(x @ w1 + b1, 0.0)
    h = jnp.maximum(h @ w2 + b2, 0.0)
    h = jnp.maximum(h @ w3 + b3, 0.0)
    return jax.nn.sigmoid(h @ wp)[:, 0]


if __name__ == "__main__":
    features_number = 32
    layers = [64, 64, 32]

    key = jax.random.PRNGKey(0)
    k_x, k_x2, k1, k2, k3, kp = jax.random.split(key, 6)

    # Deterministic xavier-normal weights, zero biases (shapes from __init__).
    w1 = xavier_normal(k1, features_number, layers[0])
    b1 = jnp.zeros((layers[0],), jnp.float32)
    w2 = xavier_normal(k2, layers[0], layers[1])
    b2 = jnp.zeros((layers[1],), jnp.float32)
    w3 = xavier_normal(k3, layers[1], layers[2])
    b3 = jnp.zeros((layers[2],), jnp.float32)
    wp = xavier_normal(kp, layers[2], 1)  # predict layer, no bias: [32, 1]

    # Pack / normalize parameters ONCE (outside the jitted hot path).
    params = prepare_params(w1, b1, w2, b2, w3, b3, wp)

    # --- module default batch: single-block path (grid=(1,)) ---
    batch = 512
    x = jax.random.normal(k_x, (batch, features_number), dtype=jnp.float32)
    pred = jax.block_until_ready(mlp_forward(x, *params))
    assert pred.shape == (batch,)
    ref = reference_forward(x, w1, b1, w2, b2, w3, b3, wp)
    assert jnp.allclose(pred, ref, atol=1e-4, rtol=1e-4), "512-row path mismatch"

    # --- full-dataset batch from the spec (5120 rows): tiled path, 4 x 1280 ---
    batch2 = 5120
    x2 = jax.random.normal(k_x2, (batch2, features_number), dtype=jnp.float32)
    pred2 = jax.block_until_ready(mlp_forward(x2, *params))
    assert pred2.shape == (batch2,)
    ref2 = reference_forward(x2, w1, b1, w2, b2, w3, b3, wp)
    assert jnp.allclose(pred2, ref2, atol=1e-4, rtol=1e-4), "tiled path mismatch"

    print("KERNEL_OK")
</pallas_src>

<mosaic_0001>
module attributes {stable_mosaic.version = 11 : i64} {
  func.func @mlp_kernel(%arg0: i32, %arg1: memref<512x32xf32, #tpu.memory_space<vmem>>, %arg2: memref<32x64xf32, #tpu.memory_space<vmem>>, %arg3: memref<64x64xf32, #tpu.memory_space<vmem>>, %arg4: memref<64x32xf32, #tpu.memory_space<vmem>>, %arg5: memref<4x64xf32, #tpu.memory_space<vmem>>, %arg6: memref<1x1x512xf32, #tpu.memory_space<vmem>>) attributes {dimension_semantics = [#tpu.dimension_semantics<arbitrary>], iteration_bounds = array<i64: 1>, scalar_prefetch = 0 : i64, scratch_operands = 0 : i64, tpu.core_type = #tpu.core_type<tc>, window_params = [{transform_indices = @transform_0, window_bounds = array<i64: 512, 32>}, {pipeline_mode = #tpu.pipeline_mode<synchronous>, transform_indices = @transform_1, window_bounds = array<i64: 32, 64>}, {pipeline_mode = #tpu.pipeline_mode<synchronous>, transform_indices = @transform_2, window_bounds = array<i64: 64, 64>}, {pipeline_mode = #tpu.pipeline_mode<synchronous>, transform_indices = @transform_3, window_bounds = array<i64: 64, 32>}, {pipeline_mode = #tpu.pipeline_mode<synchronous>, transform_indices = @transform_4, window_bounds = array<i64: 4, 64>}, {transform_indices = @transform_5, window_bounds = array<i64: 1, 1, 512>}]} {
    %c0 = arith.constant 0 : index
    %c0_0 = arith.constant 0 : index
    %0 = vector.load %arg5[%c0, %c0_0] : memref<4x64xf32, #tpu.memory_space<vmem>>, vector<4x64xf32>
    %1 = vector.extract_strided_slice %0 {offsets = [0, 0], sizes = [1, 64], strides = [1, 1]} : vector<4x64xf32> to vector<1x64xf32>
    %2 = vector.extract_strided_slice %0 {offsets = [1, 0], sizes = [1, 64], strides = [1, 1]} : vector<4x64xf32> to vector<1x64xf32>
    %3 = vector.extract_strided_slice %0 {offsets = [2, 0], sizes = [1, 32], strides = [1, 1]} : vector<4x64xf32> to vector<1x32xf32>
    %4 = vector.extract_strided_slice %0 {offsets = [3, 0], sizes = [1, 32], strides = [1, 1]} : vector<4x64xf32> to vector<1x32xf32>
    %c0_1 = arith.constant 0 : index
    %c0_2 = arith.constant 0 : index
    %5 = vector.load %arg1[%c0_1, %c0_2] : memref<512x32xf32, #tpu.memory_space<vmem>>, vector<512x32xf32>
    %c0_3 = arith.constant 0 : index
    %c0_4 = arith.constant 0 : index
    %6 = vector.load %arg2[%c0_3, %c0_4] : memref<32x64xf32, #tpu.memory_space<vmem>>, vector<32x64xf32>
    %cst = arith.constant dense<0.000000e+00> : vector<512x64xf32>
    %7 = tpu.matmul %5, %6, %cst {dimension_numbers = #tpu.dot_dimension_numbers<[1], [0], [0], [1], [0, 0, 1, 1], [], []>} : vector<512x32xf32>, vector<32x64xf32>, vector<512x64xf32> -> vector<512x64xf32>
    %8 = vector.broadcast %1 : vector<1x64xf32> to vector<512x64xf32>
    %9 = arith.addf %7, %8 : vector<512x64xf32>
    %cst_5 = arith.constant 0.000000e+00 : f32
    %10 = vector.broadcast %cst_5 : f32 to vector<512x64xf32>
    %11 = arith.maximumf %9, %10 : vector<512x64xf32>
    %c0_6 = arith.constant 0 : index
    %c0_7 = arith.constant 0 : index
    %12 = vector.load %arg3[%c0_6, %c0_7] : memref<64x64xf32, #tpu.memory_space<vmem>>, vector<64x64xf32>
    %cst_8 = arith.constant dense<0.000000e+00> : vector<512x64xf32>
    %13 = tpu.matmul %11, %12, %cst_8 {dimension_numbers = #tpu.dot_dimension_numbers<[1], [0], [0], [1], [0, 0, 1, 1], [], []>} : vector<512x64xf32>, vector<64x64xf32>, vector<512x64xf32> -> vector<512x64xf32>
    %14 = vector.broadcast %2 : vector<1x64xf32> to vector<512x64xf32>
    %15 = arith.addf %13, %14 : vector<512x64xf32>
    %cst_9 = arith.constant 0.000000e+00 : f32
    %16 = vector.broadcast %cst_9 : f32 to vector<512x64xf32>
    %17 = arith.maximumf %15, %16 : vector<512x64xf32>
    %c0_10 = arith.constant 0 : index
    %c0_11 = arith.constant 0 : index
    %18 = vector.load %arg4[%c0_10, %c0_11] : memref<64x32xf32, #tpu.memory_space<vmem>>, vector<64x32xf32>
    %cst_12 = arith.constant dense<0.000000e+00> : vector<512x32xf32>
    %19 = tpu.matmul %17, %18, %cst_12 {dimension_numbers = #tpu.dot_dimension_numbers<[1], [0], [0], [1], [0, 0, 1, 1], [], []>} : vector<512x64xf32>, vector<64x32xf32>, vector<512x32xf32> -> vector<512x32xf32>
    %20 = vector.broadcast %3 : vector<1x32xf32> to vector<512x32xf32>
    %21 = arith.addf %19, %20 : vector<512x32xf32>
    %cst_13 = arith.constant 0.000000e+00 : f32
    %22 = vector.broadcast %cst_13 : f32 to vector<512x32xf32>
    %23 = arith.maximumf %21, %22 : vector<512x32xf32>
    %cst_14 = arith.constant dense<0.000000e+00> : vector<1x512xf32>
    %24 = tpu.matmul %4, %23, %cst_14 {dimension_numbers = #tpu.dot_dimension_numbers<[1], [1], [0], [0], [0, 0, 1, 0], [], []>} : vector<1x32xf32>, vector<512x32xf32>, vector<1x512xf32> -> vector<1x512xf32>
    %25 = arith.negf %24 : vector<1x512xf32>
    %26 = math.exp %25 : vector<1x512xf32>
    %cst_15 = arith.constant 1.000000e+00 : f32
    %27 = vector.broadcast %cst_15 : f32 to vector<1x512xf32>
    %28 = arith.addf %27, %26 : vector<1x512xf32>
    %29 = arith.divf %27, %28 : vector<1x512xf32>
    %c0_16 = arith.constant 0 : index
    %c0_17 = arith.constant 0 : index
    %c0_18 = arith.constant 0 : index
    %30 = vector.load %arg6[%c0_16, %c0_17, %c0_18] : memref<1x1x512xf32, #tpu.memory_space<vmem>>, vector<1x1x512xf32>
    %31 = vector.shape_cast %30 : vector<1x1x512xf32> to vector<1x512xf32>
    %32 = vector.shape_cast %29 : vector<1x512xf32> to vector<1x1x512xf32>
    tpu.vector_store %arg6[%c0_16, %c0_17, %c0_18], %32 {strides = array<i32>} : memref<1x1x512xf32, #tpu.memory_space<vmem>>, vector<1x1x512xf32>,
    return
  }
  func.func @transform_0(%arg0: i32) -> (i32, i32) {
    %c0_i32 = arith.constant 0 : i32
    %c0_i32_0 = arith.constant 0 : i32
    return %arg0, %c0_i32 : i32, i32
  }
  func.func @transform_1(%arg0: i32) -> (i32, i32) {
    %c0_i32 = arith.constant 0 : i32
    %c0_i32_0 = arith.constant 0 : i32
    %c0_i32_1 = arith.constant 0 : i32
    return %c0_i32, %c0_i32_0 : i32, i32
  }
  func.func @transform_2(%arg0: i32) -> (i32, i32) {
    %c0_i32 = arith.constant 0 : i32
    %c0_i32_0 = arith.constant 0 : i32
    %c0_i32_1 = arith.constant 0 : i32
    return %c0_i32, %c0_i32_0 : i32, i32
  }
  func.func @transform_3(%arg0: i32) -> (i32, i32) {
    %c0_i32 = arith.constant 0 : i32
    %c0_i32_0 = arith.constant 0 : i32
    %c0_i32_1 = arith.constant 0 : i32
    return %c0_i32, %c0_i32_0 : i32, i32
  }
  func.func @transform_4(%arg0: i32) -> (i32, i32) {
    %c0_i32 = arith.constant 0 : i32
    %c0_i32_0 = arith.constant 0 : i32
    %c0_i32_1 = arith.constant 0 : i32
    return %c0_i32, %c0_i32_0 : i32, i32
  }
  func.func @transform_5(%arg0: i32) -> (i32, i32, i32) {
    %c0_i32 = arith.constant 0 : i32
    %c0_i32_0 = arith.constant 0 : i32
    %c0_i32_1 = arith.constant 0 : i32
    return %arg0, %c0_i32, %c0_i32_0 : i32, i32, i32
  }
}

</mosaic_0001>

<llo_original>
// kernel: mlp_forward.1
$region0: #{mlp_forward.1}
  #allocation0 [shape = 'u32[]', space=smem, size = 0x4, offset = 0x4, fixed_abs, tag = 'smem constant byte address 0x4 - core index']
  #allocation1 [shape = 'u32[144,128]{1,0:T(1,128)}', space=vmem, size = 0x12000, scoped, tag = 'internal scratch']
  %s0 = inlined_call_operand.vmem [shape: f32[512,32], index: 0, kind: input, shape index: {}]
  %s1 = inlined_call_operand.vmem [shape: f32[32,64], index: 1, kind: input, shape index: {}]
  %s2 = inlined_call_operand.vmem [shape: f32[64,64], index: 2, kind: input, shape index: {}]
  %s3 = inlined_call_operand.vmem [shape: f32[64,32], index: 3, kind: input, shape index: {}]
  %s4 = inlined_call_operand.vmem [shape: f32[4,64], index: 4, kind: input, shape index: {}]
  %s5 = inlined_call_operand.hbm [shape: f32[1,1,512], index: 5, kind: output, shape index: {}]
  %s6 = sld [smem:[#allocation0]]
  $region30: #{mlp_forward.1} parent=0
    _
  %s8 = ssub.s32 1, %s6
  %s9 = scalar_select 0, %s8, %s6
  $region1: #{mlp_forward.1} parent=0
    #allocation2 [shape = 'u8[2048]{0}', space=vmem, size = 0x800, scoped, tag = 'output window, operand 0, single buffered']
    #allocation3 [shape = 's32[1]{0}', space=sflag, size = 0x4, scoped, tag = 'scoped memory for mlp_forward.1']
    %10 = vsyncpa [#allocation3], 0
    // Predicated region
    $region2: #{mlp_forward.1} parent=1 // pred_check
      _
    $region3: #{mlp_forward.1} parent=1 // pred_check_branch
      %12 = sbr.rel (0) target = $region5
    $region4: #{mlp_forward.1} parent=1 // pred_region
      _
    $region5: #{mlp_forward.1} parent=1 // pred_fallthru
      _
    // Predicated region
    $region6: #{mlp_forward.1} parent=1 // pred_check
      _
    $region7: #{mlp_forward.1} parent=1 // pred_check_branch
      %14 = sbr.rel (0) target = $region9
    $region8: #{mlp_forward.1} parent=1 // pred_region
      _
    $region9: #{mlp_forward.1} parent=1 // pred_fallthru
      _
    // Predicated region
    $region10: #{mlp_forward.1} parent=1 // pred_check
      _
    $region11: #{mlp_forward.1} parent=1 // pred_check_branch
      %16 = sbr.rel (0) target = $region13
    $region12: #{mlp_forward.1} parent=1 // pred_region
      _
    $region13: #{mlp_forward.1} parent=1 // pred_fallthru
      _
    // Predicated region
    $region14: #{mlp_forward.1} parent=1 // pred_check
      _
    $region15: #{mlp_forward.1} parent=1 // pred_check_branch
      %18 = sbr.rel (0) target = $region17
    $region16: #{mlp_forward.1} parent=1 // pred_region
      _
    $region17: #{mlp_forward.1} parent=1 // pred_fallthru
      _
    // Predicated region
    $region18: #{mlp_forward.1} parent=1 // pred_check
      _
    $region19: #{mlp_forward.1} parent=1 // pred_check_branch
      %20 = sbr.rel (0) target = $region21
    $region20: #{mlp_forward.1} parent=1 // pred_region
      _
    $region21: #{mlp_forward.1} parent=1 // pred_fallthru
      _
    %v21 = vld [vmem:[%s4] sm:$0xf]
    %v22 = vld [vmem:[%s0] sm:$0xff]
    %v23 = vld [vmem:[%s0 + $0x8] sm:$0xff]
    %v24 = vld [vmem:[%s0 + $0x10] sm:$0xff]
    %v25 = vld [vmem:[%s0 + $0x18] sm:$0xff]
    %v26 = vld [vmem:[%s0 + $0x20] sm:$0xff]
    %v27 = vld [vmem:[%s0 + $0x28] sm:$0xff]
    %v28 = vld [vmem:[%s0 + $0x30] sm:$0xff]
    %v29 = vld [vmem:[%s0 + $0x38] sm:$0xff]
    %v30 = vld [vmem:[%s0 + $0x40] sm:$0xff]
    %v31 = vld [vmem:[%s0 + $0x48] sm:$0xff]
    %v32 = vld [vmem:[%s0 + $0x50] sm:$0xff]
    %v33 = vld [vmem:[%s0 + $0x58] sm:$0xff]
    %v34 = vld [vmem:[%s0 + $0x60] sm:$0xff]
    %v35 = vld [vmem:[%s0 + $0x68] sm:$0xff]
    %v36 = vld [vmem:[%s0 + $0x70] sm:$0xff]
    %v37 = vld [vmem:[%s0 + $0x78] sm:$0xff]
    %v38 = vld [vmem:[%s0 + $0x80] sm:$0xff]
    %v39 = vld [vmem:[%s0 + $0x88] sm:$0xff]
    %v40 = vld [vmem:[%s0 + $0x90] sm:$0xff]
    %v41 = vld [vmem:[%s0 + $0x98] sm:$0xff]
    %v42 = vld [vmem:[%s0 + $0xa0] sm:$0xff]
    %v43 = vld [vmem:[%s0 + $0xa8] sm:$0xff]
    %v44 = vld [vmem:[%s0 + $0xb0] sm:$0xff]
    %v45 = vld [vmem:[%s0 + $0xb8] sm:$0xff]
    %v46 = vld [vmem:[%s0 + $0xc0] sm:$0xff]
    %v47 = vld [vmem:[%s0 + $0xc8] sm:$0xff]
    %v48 = vld [vmem:[%s0 + $0xd0] sm:$0xff]
    %v49 = vld [vmem:[%s0 + $0xd8] sm:$0xff]
    %v50 = vld [vmem:[%s0 + $0xe0] sm:$0xff]
    %v51 = vld [vmem:[%s0 + $0xe8] sm:$0xff]
    %v52 = vld [vmem:[%s0 + $0xf0] sm:$0xff]
    %v53 = vld [vmem:[%s0 + $0xf8] sm:$0xff]
    %v54 = vld [vmem:[%s0 + $0x100] sm:$0xff]
    %v55 = vld [vmem:[%s0 + $0x108] sm:$0xff]
    %v56 = vld [vmem:[%s0 + $0x110] sm:$0xff]
    %v57 = vld [vmem:[%s0 + $0x118] sm:$0xff]
    %v58 = vld [vmem:[%s0 + $0x120] sm:$0xff]
    %v59 = vld [vmem:[%s0 + $0x128] sm:$0xff]
    %v60 = vld [vmem:[%s0 + $0x130] sm:$0xff]
    %v61 = vld [vmem:[%s0 + $0x138] sm:$0xff]
    %v62 = vld [vmem:[%s0 + $0x140] sm:$0xff]
    %v63 = vld [vmem:[%s0 + $0x148] sm:$0xff]
    %v64 = vld [vmem:[%s0 + $0x150] sm:$0xff]
    %v65 = vld [vmem:[%s0 + $0x158] sm:$0xff]
    %v66 = vld [vmem:[%s0 + $0x160] sm:$0xff]
    %v67 = vld [vmem:[%s0 + $0x168] sm:$0xff]
    %v68 = vld [vmem:[%s0 + $0x170] sm:$0xff]
    %v69 = vld [vmem:[%s0 + $0x178] sm:$0xff]
    %v70 = vld [vmem:[%s0 + $0x180] sm:$0xff]
    %v71 = vld [vmem:[%s0 + $0x188] sm:$0xff]
    %v72 = vld [vmem:[%s0 + $0x190] sm:$0xff]
    %v73 = vld [vmem:[%s0 + $0x198] sm:$0xff]
    %v74 = vld [vmem:[%s0 + $0x1a0] sm:$0xff]
    %v75 = vld [vmem:[%s0 + $0x1a8] sm:$0xff]
    %v76 = vld [vmem:[%s0 + $0x1b0] sm:$0xff]
    %v77 = vld [vmem:[%s0 + $0x1b8] sm:$0xff]
    %v78 = vld [vmem:[%s0 + $0x1c0] sm:$0xff]
    %v79 = vld [vmem:[%s0 + $0x1c8] sm:$0xff]
    %v80 = vld [vmem:[%s0 + $0x1d0] sm:$0xff]
    %v81 = vld [vmem:[%s0 + $0x1d8] sm:$0xff]
    %v82 = vld [vmem:[%s0 + $0x1e0] sm:$0xff]
    %v83 = vld [vmem:[%s0 + $0x1e8] sm:$0xff]
    %v84 = vld [vmem:[%s0 + $0x1f0] sm:$0xff]
    %v85 = vld [vmem:[%s0 + $0x1f8] sm:$0xff]
    %v86 = vld [vmem:[%s1] sm:$0xff]
    %v87 = vld [vmem:[%s1 + $0x8] sm:$0xff]
    %v88 = vld [vmem:[%s1 + $0x10] sm:$0xff]
    %v89 = vld [vmem:[%s1 + $0x18] sm:$0xff]
    %v90 = vlaneseq
    %v91 = vshrl.u32 %v90, 7
    %v92 = vsub.s32 0, %v91
    %v93 = vrot.slane %v21, %v92
    %vm94 = vcmask 261120
    %v96 = vsel %vm94, %v22, 0
    %v99 = vsel %vm94, %v23, 0
    %v102 = vsel %vm94, %v24, 0
    %v105 = vsel %vm94, %v25, 0
    %v108 = vsel %vm94, %v26, 0
    %v111 = vsel %vm94, %v27, 0
    %v114 = vsel %vm94, %v28, 0
    %v117 = vsel %vm94, %v29, 0
    %v120 = vsel %vm94, %v30, 0
    %v123 = vsel %vm94, %v31, 0
    %v126 = vsel %vm94, %v32, 0
    %v129 = vsel %vm94, %v33, 0
    %v132 = vsel %vm94, %v34, 0
    %v135 = vsel %vm94, %v35, 0
    %v138 = vsel %vm94, %v36, 0
    %v141 = vsel %vm94, %v37, 0
    %v144 = vsel %vm94, %v38, 0
    %v147 = vsel %vm94, %v39, 0
    %v150 = vsel %vm94, %v40, 0
    %v153 = vsel %vm94, %v41, 0
    %v156 = vsel %vm94, %v42, 0
    %v159 = vsel %vm94, %v43, 0
    %v162 = vsel %vm94, %v44, 0
    %v165 = vsel %vm94, %v45, 0
    %v168 = vsel %vm94, %v46, 0
    %v171 = vsel %vm94, %v47, 0
    %v174 = vsel %vm94, %v48, 0
    %v177 = vsel %vm94, %v49, 0
    %v180 = vsel %vm94, %v50, 0
    %v183 = vsel %vm94, %v51, 0
    %v186 = vsel %vm94, %v52, 0
    %v189 = vsel %vm94, %v53, 0
    %v192 = vsel %vm94, %v54, 0
    %v195 = vsel %vm94, %v55, 0
    %v198 = vsel %vm94, %v56, 0
    %v201 = vsel %vm94, %v57, 0
    %v204 = vsel %vm94, %v58, 0
    %v207 = vsel %vm94, %v59, 0
    %v210 = vsel %vm94, %v60, 0
    %v213 = vsel %vm94, %v61, 0
    %v216 = vsel %vm94, %v62, 0
    %v219 = vsel %vm94, %v63, 0
    %v222 = vsel %vm94, %v64, 0
    %v225 = vsel %vm94, %v65, 0
    %v228 = vsel %vm94, %v66, 0
    %v231 = vsel %vm94, %v67, 0
    %v234 = vsel %vm94, %v68, 0
    %v237 = vsel %vm94, %v69, 0
    %v240 = vsel %vm94, %v70, 0
    %v243 = vsel %vm94, %v71, 0
    %v246 = vsel %vm94, %v72, 0
    %v249 = vsel %vm94, %v73, 0
    %v252 = vsel %vm94, %v74, 0
    %v255 = vsel %vm94, %v75, 0
    %v258 = vsel %vm94, %v76, 0
    %v261 = vsel %vm94, %v77, 0
    %v264 = vsel %vm94, %v78, 0
    %v267 = vsel %vm94, %v79, 0
    %v270 = vsel %vm94, %v80, 0
    %v273 = vsel %vm94, %v81, 0
    %v276 = vsel %vm94, %v82, 0
    %v279 = vsel %vm94, %v83, 0
    %v282 = vsel %vm94, %v84, 0
    %v285 = vsel %vm94, %v85, 0
    %287 = vmatprep.subr.mxu0 0.0
    %288 = vmatpush1.msra.mxu0 0.0
    %289 = vmatprep.subr.mxu0 0.0
    %290 = vmatpush1.msra.mxu0 0.0
    %291 = vmatprep.subr.mxu0 0.0
    %292 = vmatpush1.msra.mxu0 0.0
    %293 = vmatprep.subr.mxu0 0.0
    %294 = vmatpush1.msra.mxu0 0.0
    %295 = vmatprep.subr.mxu0 0.0
    %296 = vmatpush1.msra.mxu0 0.0
    %297 = vmatprep.subr.mxu0 0.0
    %298 = vmatpush1.msra.mxu0 0.0
    %299 = vmatprep.subr.mxu0 0.0
    %300 = vmatpush1.msra.mxu0 0.0
    %301 = vmatprep.subr.mxu0 0.0
    %302 = vmatpush1.msra.mxu0 0.0
    %303 = vmatprep.subr.mxu0 0.0
    %304 = vmatpush1.msra.mxu0 0.0
    %305 = vmatprep.subr.mxu0 0.0
    %306 = vmatpush1.msra.mxu0 0.0
    %307 = vmatprep.subr.mxu0 0.0
    %308 = vmatpush1.msra.mxu0 0.0
    %309 = vmatprep.subr.mxu0 0.0
    %310 = vmatpush1.msra.mxu0 0.0
    %311 = vmatprep.subr.mxu0 0.0
    %312 = vmatpush1.msra.mxu0 %v89
    %313 = vmatprep.subr.mxu0 0.0
    %314 = vmatpush1.msra.mxu0 %v88
    %315 = vmatprep.subr.mxu0 0.0
    %316 = vmatpush1.msra.mxu0 %v87
    %317 = vmatprep.subr.mxu0 0.0
    %318 = vmatpush1.msra.mxu0 %v86
    %319 = vmatprep.subr.mxu0 0.0
    %320 = vmatpush2.msra.mxu0 0.0
    %321 = vmatprep.subr.mxu0 0.0
    %322 = vmatpush2.msra.mxu0 0.0
    %323 = vmatprep.subr.mxu0 0.0
    %324 = vmatpush2.msra.mxu0 0.0
    %325 = vmatprep.subr.mxu0 0.0
    %326 = vmatpush2.msra.mxu0 0.0
    %327 = vmatprep.subr.mxu0 0.0
    %328 = vmatpush2.msra.mxu0 0.0
    %329 = vmatprep.subr.mxu0 0.0
    %330 = vmatpush2.msra.mxu0 0.0
    %331 = vmatprep.subr.mxu0 0.0
    %332 = vmatpush2.msra.mxu0 0.0
    %333 = vmatprep.subr.mxu0 0.0
    %334 = vmatpush2.msra.mxu0 0.0
    %335 = vmatprep.subr.mxu0 0.0
    %336 = vmatpush2.msra.mxu0 0.0
    %337 = vmatprep.subr.mxu0 0.0
    %338 = vmatpush2.msra.mxu0 0.0
    %339 = vmatprep.subr.mxu0 0.0
    %340 = vmatpush2.msra.mxu0 0.0
    %341 = vmatprep.subr.mxu0 0.0
    %342 = vmatpush2.msra.mxu0 0.0
    %343 = vmatprep.subr.mxu0 0.0
    %344 = vmatpush2.msra.mxu0 0.0
    %345 = vmatprep.subr.mxu0 0.0
    %346 = vmatpush2.msra.mxu0 0.0
    %347 = vmatprep.subr.mxu0 0.0
    %348 = vmatpush2.msra.mxu0 0.0
    %349 = vmatprep.subr.mxu0 0.0
    %350 = vmatpush2.msra.mxu0 0.0
    %351 = vmatprep.mubr.f32.mxu0 0.0
    %352 = vmatmul.mubr.f32.gmra.mxu0 %v96
    %v353 = vpop.f32.mrf.mxu0
    %v354 = vadd.f32 %v93, %v353
    %v355 = vpop.f32.mrf.mxu0
    %356 = vmatprep.mubr.f32.mxu0 0.0
    %357 = vmatmul.mubr.f32.gmra.mxu0 %v99
    %v358 = vpop.f32.mrf.mxu0
    %v359 = vadd.f32 %v93, %v358
    %v360 = vpop.f32.mrf.mxu0
    %361 = vmatprep.mubr.f32.mxu0 0.0
    %362 = vmatmul.mubr.f32.gmra.mxu0 %v102
    %v363 = vpop.f32.mrf.mxu0
    %v364 = vadd.f32 %v93, %v363
    %v365 = vpop.f32.mrf.mxu0
    %366 = vmatprep.mubr.f32.mxu0 0.0
    %367 = vmatmul.mubr.f32.gmra.mxu0 %v105
    %v368 = vpop.f32.mrf.mxu0
    %v369 = vadd.f32 %v93, %v368
    %v370 = vpop.f32.mrf.mxu0
    %371 = vmatprep.mubr.f32.mxu0 0.0
    %372 = vmatmul.mubr.f32.gmra.mxu0 %v108
    %v373 = vpop.f32.mrf.mxu0
    %v374 = vadd.f32 %v93, %v373
    %v375 = vpop.f32.mrf.mxu0
    %376 = vmatprep.mubr.f32.mxu0 0.0
    %377 = vmatmul.mubr.f32.gmra.mxu0 %v111
    %v378 = vpop.f32.mrf.mxu0
    %v379 = vadd.f32 %v93, %v378
    %v380 = vpop.f32.mrf.mxu0
    %381 = vmatprep.mubr.f32.mxu0 0.0
    %382 = vmatmul.mubr.f32.gmra.mxu0 %v114
    %v383 = vpop.f32.mrf.mxu0
    %v384 = vadd.f32 %v93, %v383
    %v385 = vpop.f32.mrf.mxu0
    %386 = vmatprep.mubr.f32.mxu0 0.0
    %387 = vmatmul.mubr.f32.gmra.mxu0 %v117
    %v388 = vpop.f32.mrf.mxu0
    %v389 = vadd.f32 %v93, %v388
    %v390 = vpop.f32.mrf.mxu0
    %391 = vmatprep.mubr.f32.mxu0 0.0
    %392 = vmatmul.mubr.f32.gmra.mxu0 %v120
    %v393 = vpop.f32.mrf.mxu0
    %v394 = vadd.f32 %v93, %v393
    %v395 = vpop.f32.mrf.mxu0
    %396 = vmatprep.mubr.f32.mxu0 0.0
    %397 = vmatmul.mubr.f32.gmra.mxu0 %v123
    %v398 = vpop.f32.mrf.mxu0
    %v399 = vadd.f32 %v93, %v398
    %v400 = vpop.f32.mrf.mxu0
    %401 = vmatprep.mubr.f32.mxu0 0.0
    %402 = vmatmul.mubr.f32.gmra.mxu0 %v126
    %v403 = vpop.f32.mrf.mxu0
    %v404 = vadd.f32 %v93, %v403
    %v405 = vpop.f32.mrf.mxu0
    %406 = vmatprep.mubr.f32.mxu0 0.0
    %407 = vmatmul.mubr.f32.gmra.mxu0 %v129
    %v408 = vpop.f32.mrf.mxu0
    %v409 = vadd.f32 %v93, %v408
    %v410 = vpop.f32.mrf.mxu0
    %411 = vmatprep.mubr.f32.mxu0 0.0
    %412 = vmatmul.mubr.f32.gmra.mxu0 %v132
    %v413 = vpop.f32.mrf.mxu0
    %v414 = vadd.f32 %v93, %v413
    %v415 = vpop.f32.mrf.mxu0
    %416 = vmatprep.mubr.f32.mxu0 0.0
    %417 = vmatmul.mubr.f32.gmra.mxu0 %v135
    %v418 = vpop.f32.mrf.mxu0
    %v419 = vadd.f32 %v93, %v418
    %v420 = vpop.f32.mrf.mxu0
    %421 = vmatprep.mubr.f32.mxu0 0.0
    %422 = vmatmul.mubr.f32.gmra.mxu0 %v138
    %v423 = vpop.f32.mrf.mxu0
    %v424 = vadd.f32 %v93, %v423
    %v425 = vpop.f32.mrf.mxu0
    %426 = vmatprep.mubr.f32.mxu0 0.0
    %427 = vmatmul.mubr.f32.gmra.mxu0 %v141
    %v428 = vpop.f32.mrf.mxu0
    %v429 = vadd.f32 %v93, %v428
    %v430 = vpop.f32.mrf.mxu0
    %431 = vmatprep.mubr.f32.mxu0 0.0
    %432 = vmatmul.mubr.f32.gmra.mxu0 %v144
    %v433 = vpop.f32.mrf.mxu0
    %v434 = vadd.f32 %v93, %v433
    %v435 = vpop.f32.mrf.mxu0
    %436 = vmatprep.mubr.f32.mxu0 0.0
    %437 = vmatmul.mubr.f32.gmra.mxu0 %v147
    %v438 = vpop.f32.mrf.mxu0
    %v439 = vadd.f32 %v93, %v438
    %v440 = vpop.f32.mrf.mxu0
    %441 = vmatprep.mubr.f32.mxu0 0.0
    %442 = vmatmul.mubr.f32.gmra.mxu0 %v150
    %v443 = vpop.f32.mrf.mxu0
    %v444 = vadd.f32 %v93, %v443
    %v445 = vpop.f32.mrf.mxu0
    %446 = vmatprep.mubr.f32.mxu0 0.0
    %447 = vmatmul.mubr.f32.gmra.mxu0 %v153
    %v448 = vpop.f32.mrf.mxu0
    %v449 = vadd.f32 %v93, %v448
    %v450 = vpop.f32.mrf.mxu0
    %451 = vmatprep.mubr.f32.mxu0 0.0
    %452 = vmatmul.mubr.f32.gmra.mxu0 %v156
    %v453 = vpop.f32.mrf.mxu0
    %v454 = vadd.f32 %v93, %v453
    %v455 = vpop.f32.mrf.mxu0
    %456 = vmatprep.mubr.f32.mxu0 0.0
    %457 = vmatmul.mubr.f32.gmra.mxu0 %v159
    %v458 = vpop.f32.mrf.mxu0
    %v459 = vadd.f32 %v93, %v458
    %v460 = vpop.f32.mrf.mxu0
    %461 = vmatprep.mubr.f32.mxu0 0.0
    %462 = vmatmul.mubr.f32.gmra.mxu0 %v162
    %v463 = vpop.f32.mrf.mxu0
    %v464 = vadd.f32 %v93, %v463
    %v465 = vpop.f32.mrf.mxu0
    %466 = vmatprep.mubr.f32.mxu0 0.0
    %467 = vmatmul.mubr.f32.gmra.mxu0 %v165
    %v468 = vpop.f32.mrf.mxu0
    %v469 = vadd.f32 %v93, %v468
    %v470 = vpop.f32.mrf.mxu0
    %471 = vmatprep.mubr.f32.mxu0 0.0
    %472 = vmatmul.mubr.f32.gmra.mxu0 %v168
    %v473 = vpop.f32.mrf.mxu0
    %v474 = vadd.f32 %v93, %v473
    %v475 = vpop.f32.mrf.mxu0
    %476 = vmatprep.mubr.f32.mxu0 0.0
    %477 = vmatmul.mubr.f32.gmra.mxu0 %v171
    %v478 = vpop.f32.mrf.mxu0
    %v479 = vadd.f32 %v93, %v478
    %v480 = vpop.f32.mrf.mxu0
    %481 = vmatprep.mubr.f32.mxu0 0.0
    %482 = vmatmul.mubr.f32.gmra.mxu0 %v174
    %v483 = vpop.f32.mrf.mxu0
    %v484 = vadd.f32 %v93, %v483
    %v485 = vpop.f32.mrf.mxu0
    %486 = vmatprep.mubr.f32.mxu0 0.0
    %487 = vmatmul.mubr.f32.gmra.mxu0 %v177
    %v488 = vpop.f32.mrf.mxu0
    %v489 = vadd.f32 %v93, %v488
    %v490 = vpop.f32.mrf.mxu0
    %491 = vmatprep.mubr.f32.mxu0 0.0
    %492 = vmatmul.mubr.f32.gmra.mxu0 %v180
    %v493 = vpop.f32.mrf.mxu0
    %v494 = vadd.f32 %v93, %v493
    %v495 = vpop.f32.mrf.mxu0
    %496 = vmatprep.mubr.f32.mxu0 0.0
    %497 = vmatmul.mubr.f32.gmra.mxu0 %v183
    %v498 = vpop.f32.mrf.mxu0
    %v499 = vadd.f32 %v93, %v498
    %v500 = vpop.f32.mrf.mxu0
    %501 = vmatprep.mubr.f32.mxu0 0.0
    %502 = vmatmul.mubr.f32.gmra.mxu0 %v186
    %v503 = vpop.f32.mrf.mxu0
    %v504 = vadd.f32 %v93, %v503
    %v505 = vpop.f32.mrf.mxu0
    %506 = vmatprep.mubr.f32.mxu0 0.0
    %507 = vmatmul.mubr.f32.gmra.mxu0 %v189
    %v508 = vpop.f32.mrf.mxu0
    %v509 = vadd.f32 %v93, %v508
    %v510 = vpop.f32.mrf.mxu0
    %511 = vmatprep.mubr.f32.mxu0 0.0
    %512 = vmatmul.mubr.f32.gmra.mxu0 %v192
    %v513 = vpop.f32.mrf.mxu0
    %v514 = vadd.f32 %v93, %v513
    %v515 = vpop.f32.mrf.mxu0
    %516 = vmatprep.mubr.f32.mxu0 0.0
    %517 = vmatmul.mubr.f32.gmra.mxu0 %v195
    %v518 = vpop.f32.mrf.mxu0
    %v519 = vadd.f32 %v93, %v518
    %v520 = vpop.f32.mrf.mxu0
    %521 = vmatprep.mubr.f32.mxu0 0.0
    %522 = vmatmul.mubr.f32.gmra.mxu0 %v198
    %v523 = vpop.f32.mrf.mxu0
    %v524 = vadd.f32 %v93, %v523
    %v525 = vpop.f32.mrf.mxu0
    %526 = vmatprep.mubr.f32.mxu0 0.0
    %527 = vmatmul.mubr.f32.gmra.mxu0 %v201
    %v528 = vpop.f32.mrf.mxu0
    %v529 = vadd.f32 %v93, %v528
    %v530 = vpop.f32.mrf.mxu0
    %531 = vmatprep.mubr.f32.mxu0 0.0
    %532 = vmatmul.mubr.f32.gmra.mxu0 %v204
    %v533 = vpop.f32.mrf.mxu0
    %v534 = vadd.f32 %v93, %v533
    %v535 = vpop.f32.mrf.mxu0
    %536 = vmatprep.mubr.f32.mxu0 0.0
    %537 = vmatmul.mubr.f32.gmra.mxu0 %v207
    %v538 = vpop.f32.mrf.mxu0
    %v539 = vadd.f32 %v93, %v538
    %v540 = vpop.f32.mrf.mxu0
    %541 = vmatprep.mubr.f32.mxu0 0.0
    %542 = vmatmul.mubr.f32.gmra.mxu0 %v210
    %v543 = vpop.f32.mrf.mxu0
    %v544 = vadd.f32 %v93, %v543
    %v545 = vpop.f32.mrf.mxu0
    %546 = vmatprep.mubr.f32.mxu0 0.0
    %547 = vmatmul.mubr.f32.gmra.mxu0 %v213
    %v548 = vpop.f32.mrf.mxu0
    %v549 = vadd.f32 %v93, %v548
    %v550 = vpop.f32.mrf.mxu0
    %551 = vmatprep.mubr.f32.mxu0 0.0
    %552 = vmatmul.mubr.f32.gmra.mxu0 %v216
    %v553 = vpop.f32.mrf.mxu0
    %v554 = vadd.f32 %v93, %v553
    %v555 = vpop.f32.mrf.mxu0
    %556 = vmatprep.mubr.f32.mxu0 0.0
    %557 = vmatmul.mubr.f32.gmra.mxu0 %v219
    %v558 = vpop.f32.mrf.mxu0
    %v559 = vadd.f32 %v93, %v558
    %v560 = vpop.f32.mrf.mxu0
    %561 = vmatprep.mubr.f32.mxu0 0.0
    %562 = vmatmul.mubr.f32.gmra.mxu0 %v222
    %v563 = vpop.f32.mrf.mxu0
    %v564 = vadd.f32 %v93, %v563
    %v565 = vpop.f32.mrf.mxu0
    %566 = vmatprep.mubr.f32.mxu0 0.0
    %567 = vmatmul.mubr.f32.gmra.mxu0 %v225
    %v568 = vpop.f32.mrf.mxu0
    %v569 = vadd.f32 %v93, %v568
    %v570 = vpop.f32.mrf.mxu0
    %571 = vmatprep.mubr.f32.mxu0 0.0
    %572 = vmatmul.mubr.f32.gmra.mxu0 %v228
    %v573 = vpop.f32.mrf.mxu0
    %v574 = vadd.f32 %v93, %v573
    %v575 = vpop.f32.mrf.mxu0
    %576 = vmatprep.mubr.f32.mxu0 0.0
    %577 = vmatmul.mubr.f32.gmra.mxu0 %v231
    %v578 = vpop.f32.mrf.mxu0
    %v579 = vadd.f32 %v93, %v578
    %v580 = vpop.f32.mrf.mxu0
    %581 = vmatprep.mubr.f32.mxu0 0.0
    %582 = vmatmul.mubr.f32.gmra.mxu0 %v234
    %v583 = vpop.f32.mrf.mxu0
    %v584 = vadd.f32 %v93, %v583
    %v585 = vpop.f32.mrf.mxu0
    %586 = vmatprep.mubr.f32.mxu0 0.0
    %587 = vmatmul.mubr.f32.gmra.mxu0 %v237
    %v588 = vpop.f32.mrf.mxu0
    %v589 = vadd.f32 %v93, %v588
    %v590 = vpop.f32.mrf.mxu0
    %591 = vmatprep.mubr.f32.mxu0 0.0
    %592 = vmatmul.mubr.f32.gmra.mxu0 %v240
    %v593 = vpop.f32.mrf.mxu0
    %v594 = vadd.f32 %v93, %v593
    %v595 = vpop.f32.mrf.mxu0
    %596 = vmatprep.mubr.f32.mxu0 0.0
    %597 = vmatmul.mubr.f32.gmra.mxu0 %v243
    %v598 = vpop.f32.mrf.mxu0
    %v599 = vadd.f32 %v93, %v598
    %v600 = vpop.f32.mrf.mxu0
    %601 = vmatprep.mubr.f32.mxu0 0.0
    %602 = vmatmul.mubr.f32.gmra.mxu0 %v246
    %v603 = vpop.f32.mrf.mxu0
    %v604 = vadd.f32 %v93, %v603
    %v605 = vpop.f32.mrf.mxu0
    %606 = vmatprep.mubr.f32.mxu0 0.0
    %607 = vmatmul.mubr.f32.gmra.mxu0 %v249
    %v608 = vpop.f32.mrf.mxu0
    %v609 = vadd.f32 %v93, %v608
    %v610 = vpop.f32.mrf.mxu0
    %611 = vmatprep.mubr.f32.mxu0 0.0
    %612 = vmatmul.mubr.f32.gmra.mxu0 %v252
    %v613 = vpop.f32.mrf.mxu0
    %v614 = vadd.f32 %v93, %v613
    %v615 = vpop.f32.mrf.mxu0
    %616 = vmatprep.mubr.f32.mxu0 0.0
    %617 = vmatmul.mubr.f32.gmra.mxu0 %v255
    %v618 = vpop.f32.mrf.mxu0
    %v619 = vadd.f32 %v93, %v618
    %v620 = vpop.f32.mrf.mxu0
    %621 = vmatprep.mubr.f32.mxu0 0.0
    %622 = vmatmul.mubr.f32.gmra.mxu0 %v258
    %v623 = vpop.f32.mrf.mxu0
    %v624 = vadd.f32 %v93, %v623
    %v625 = vpop.f32.mrf.mxu0
    %626 = vmatprep.mubr.f32.mxu0 0.0
    %627 = vmatmul.mubr.f32.gmra.mxu0 %v261
    %v628 = vpop.f32.mrf.mxu0
    %v629 = vadd.f32 %v93, %v628
    %v630 = vpop.f32.mrf.mxu0
    %631 = vmatprep.mubr.f32.mxu0 0.0
    %632 = vmatmul.mubr.f32.gmra.mxu0 %v264
    %v633 = vpop.f32.mrf.mxu0
    %v634 = vadd.f32 %v93, %v633
    %v635 = vpop.f32.mrf.mxu0
    %636 = vmatprep.mubr.f32.mxu0 0.0
    %637 = vmatmul.mubr.f32.gmra.mxu0 %v267
    %v638 = vpop.f32.mrf.mxu0
    %v639 = vadd.f32 %v93, %v638
    %v640 = vpop.f32.mrf.mxu0
    %641 = vmatprep.mubr.f32.mxu0 0.0
    %642 = vmatmul.mubr.f32.gmra.mxu0 %v270
    %v643 = vpop.f32.mrf.mxu0
    %v644 = vadd.f32 %v93, %v643
    %v645 = vpop.f32.mrf.mxu0
    %646 = vmatprep.mubr.f32.mxu0 0.0
    %647 = vmatmul.mubr.f32.gmra.mxu0 %v273
    %v648 = vpop.f32.mrf.mxu0
    %v649 = vadd.f32 %v93, %v648
    %v650 = vpop.f32.mrf.mxu0
    %651 = vmatprep.mubr.f32.mxu0 0.0
    %652 = vmatmul.mubr.f32.gmra.mxu0 %v276
    %v653 = vpop.f32.mrf.mxu0
    %v654 = vadd.f32 %v93, %v653
    %v655 = vpop.f32.mrf.mxu0
    %656 = vmatprep.mubr.f32.mxu0 0.0
    %657 = vmatmul.mubr.f32.gmra.mxu0 %v279
    %v658 = vpop.f32.mrf.mxu0
    %v659 = vadd.f32 %v93, %v658
    %v660 = vpop.f32.mrf.mxu0
    %661 = vmatprep.mubr.f32.mxu0 0.0
    %662 = vmatmul.mubr.f32.gmra.mxu0 %v282
    %v663 = vpop.f32.mrf.mxu0
    %v664 = vadd.f32 %v93, %v663
    %v665 = vpop.f32.mrf.mxu0
    %666 = vmatprep.mubr.f32.mxu0 0.0
    %667 = vmatmul.mubr.f32.gmra.mxu0 %v285
    %v668 = vpop.f32.mrf.mxu0
    %v669 = vadd.f32 %v93, %v668
    %v670 = vpop.f32.mrf.mxu0
    %671 = vdwg.mxu0
    %v672 = vmax.f32 %v354, 0.0
    %v673 = vmax.f32 %v359, 0.0
    %v674 = vmax.f32 %v364, 0.0
    %v675 = vmax.f32 %v369, 0.0
    %v676 = vmax.f32 %v374, 0.0
    %v677 = vmax.f32 %v379, 0.0
    %v678 = vmax.f32 %v384, 0.0
    %v679 = vmax.f32 %v389, 0.0
    %v680 = vmax.f32 %v394, 0.0
    %v681 = vmax.f32 %v399, 0.0
    %v682 = vmax.f32 %v404, 0.0
    %v683 = vmax.f32 %v409, 0.0
    %v684 = vmax.f32 %v414, 0.0
    %v685 = vmax.f32 %v419, 0.0
    %v686 = vmax.f32 %v424, 0.0
    %v687 = vmax.f32 %v429, 0.0
    %v688 = vmax.f32 %v434, 0.0
    %v689 = vmax.f32 %v439, 0.0
    %v690 = vmax.f32 %v444, 0.0
    %v691 = vmax.f32 %v449, 0.0
    %v692 = vmax.f32 %v454, 0.0
    %v693 = vmax.f32 %v459, 0.0
    %v694 = vmax.f32 %v464, 0.0
    %v695 = vmax.f32 %v469, 0.0
    %v696 = vmax.f32 %v474, 0.0
    %v697 = vmax.f32 %v479, 0.0
    %v698 = vmax.f32 %v484, 0.0
    %v699 = vmax.f32 %v489, 0.0
    %v700 = vmax.f32 %v494, 0.0
    %v701 = vmax.f32 %v499, 0.0
    %v702 = vmax.f32 %v504, 0.0
    %v703 = vmax.f32 %v509, 0.0
    %v704 = vmax.f32 %v514, 0.0
    %v705 = vmax.f32 %v519, 0.0
    %v706 = vmax.f32 %v524, 0.0
    %v707 = vmax.f32 %v529, 0.0
    %v708 = vmax.f32 %v534, 0.0
    %v709 = vmax.f32 %v539, 0.0
    %v710 = vmax.f32 %v544, 0.0
    %v711 = vmax.f32 %v549, 0.0
    %v712 = vmax.f32 %v554, 0.0
    %v713 = vmax.f32 %v559, 0.0
    %v714 = vmax.f32 %v564, 0.0
    %v715 = vmax.f32 %v569, 0.0
    %v716 = vmax.f32 %v574, 0.0
    %v717 = vmax.f32 %v579, 0.0
    %v718 = vmax.f32 %v584, 0.0
    %v719 = vmax.f32 %v589, 0.0
    %v720 = vmax.f32 %v594, 0.0
    %v721 = vmax.f32 %v599, 0.0
    %v722 = vmax.f32 %v604, 0.0
    %v723 = vmax.f32 %v609, 0.0
    %v724 = vmax.f32 %v614, 0.0
    %v725 = vmax.f32 %v619, 0.0
    %v726 = vmax.f32 %v624, 0.0
    %v727 = vmax.f32 %v629, 0.0
    %v728 = vmax.f32 %v634, 0.0
    %v729 = vmax.f32 %v639, 0.0
    %v730 = vmax.f32 %v644, 0.0
    %v731 = vmax.f32 %v649, 0.0
    %v732 = vmax.f32 %v654, 0.0
    %v733 = vmax.f32 %v659, 0.0
    %v734 = vmax.f32 %v664, 0.0
    %v735 = vmax.f32 %v669, 0.0
    %v736 = vld [vmem:[%s2] sm:$0xff]
    %v737 = vld [vmem:[%s2 + $0x8] sm:$0xff]
    %v738 = vld [vmem:[%s2 + $0x10] sm:$0xff]
    %v739 = vld [vmem:[%s2 + $0x18] sm:$0xff]
    %v740 = vld [vmem:[%s2 + $0x20] sm:$0xff]
    %v741 = vld [vmem:[%s2 + $0x28] sm:$0xff]
    %v742 = vld [vmem:[%s2 + $0x30] sm:$0xff]
    %v743 = vld [vmem:[%s2 + $0x38] sm:$0xff]
    %v744 = vlaneseq
    %v745 = vshrl.u32 %v744, 7
    %v746 = vsub.s32 1, %v745
    %v747 = vrot.slane %v21, %v746
    %vm748 = vcmask 523264
    %v750 = vsel %vm748, %v672, 0
    %v753 = vsel %vm748, %v673, 0
    %v756 = vsel %vm748, %v674, 0
    %v759 = vsel %vm748, %v675, 0
    %v762 = vsel %vm748, %v676, 0
    %v765 = vsel %vm748, %v677, 0
    %v768 = vsel %vm748, %v678, 0
    %v771 = vsel %vm748, %v679, 0
    %v774 = vsel %vm748, %v680, 0
    %v777 = vsel %vm748, %v681, 0
    %v780 = vsel %vm748, %v682, 0
    %v783 = vsel %vm748, %v683, 0
    %v786 = vsel %vm748, %v684, 0
    %v789 = vsel %vm748, %v685, 0
    %v792 = vsel %vm748, %v686, 0
    %v795 = vsel %vm748, %v687, 0
    %v798 = vsel %vm748, %v688, 0
    %v801 = vsel %vm748, %v689, 0
    %v804 = vsel %vm748, %v690, 0
    %v807 = vsel %vm748, %v691, 0
    %v810 = vsel %vm748, %v692, 0
    %v813 = vsel %vm748, %v693, 0
    %v816 = vsel %vm748, %v694, 0
    %v819 = vsel %vm748, %v695, 0
    %v822 = vsel %vm748, %v696, 0
    %v825 = vsel %vm748, %v697, 0
    %v828 = vsel %vm748, %v698, 0
    %v831 = vsel %vm748, %v699, 0
    %v834 = vsel %vm748, %v700, 0
    %v837 = vsel %vm748, %v701, 0
    %v840 = vsel %vm748, %v702, 0
    %v843 = vsel %vm748, %v703, 0
    %v846 = vsel %vm748, %v704, 0
    %v849 = vsel %vm748, %v705, 0
    %v852 = vsel %vm748, %v706, 0
    %v855 = vsel %vm748, %v707, 0
    %v858 = vsel %vm748, %v708, 0
    %v861 = vsel %vm748, %v709, 0
    %v864 = vsel %vm748, %v710, 0
    %v867 = vsel %vm748, %v711, 0
    %v870 = vsel %vm748, %v712, 0
    %v873 = vsel %vm748, %v713, 0
    %v876 = vsel %vm748, %v714, 0
    %v879 = vsel %vm748, %v715, 0
    %v882 = vsel %vm748, %v716, 0
    %v885 = vsel %vm748, %v717, 0
    %v888 = vsel %vm748, %v718, 0
    %v891 = vsel %vm748, %v719, 0
    %v894 = vsel %vm748, %v720, 0
    %v897 = vsel %vm748, %v721, 0
    %v900 = vsel %vm748, %v722, 0
    %v903 = vsel %vm748, %v723, 0
    %v906 = vsel %vm748, %v724, 0
    %v909 = vsel %vm748, %v725, 0
    %v912 = vsel %vm748, %v726, 0
    %v915 = vsel %vm748, %v727, 0
    %v918 = vsel %vm748, %v728, 0
    %v921 = vsel %vm748, %v729, 0
    %v924 = vsel %vm748, %v730, 0
    %v927 = vsel %vm748, %v731, 0
    %v930 = vsel %vm748, %v732, 0
    %v933 = vsel %vm748, %v733, 0
    %v936 = vsel %vm748, %v734, 0
    %v939 = vsel %vm748, %v735, 0
    %941 = vmatprep.subr.mxu0 0.0
    %942 = vmatpush1.msra.mxu0 0.0
    %943 = vmatprep.subr.mxu0 0.0
    %944 = vmatpush1.msra.mxu0 0.0
    %945 = vmatprep.subr.mxu0 0.0
    %946 = vmatpush1.msra.mxu0 0.0
    %947 = vmatprep.subr.mxu0 0.0
    %948 = vmatpush1.msra.mxu0 0.0
    %949 = vmatprep.subr.mxu0 0.0
    %950 = vmatpush1.msra.mxu0 0.0
    %951 = vmatprep.subr.mxu0 0.0
    %952 = vmatpush1.msra.mxu0 0.0
    %953 = vmatprep.subr.mxu0 0.0
    %954 = vmatpush1.msra.mxu0 0.0
    %955 = vmatprep.subr.mxu0 0.0
    %956 = vmatpush1.msra.mxu0 0.0
    %957 = vmatprep.subr.mxu0 0.0
    %958 = vmatpush1.msra.mxu0 %v743
    %959 = vmatprep.subr.mxu0 0.0
    %960 = vmatpush1.msra.mxu0 %v742
    %961 = vmatprep.subr.mxu0 0.0
    %962 = vmatpush1.msra.mxu0 %v741
    %963 = vmatprep.subr.mxu0 0.0
    %964 = vmatpush1.msra.mxu0 %v740
    %965 = vmatprep.subr.mxu0 0.0
    %966 = vmatpush1.msra.mxu0 %v739
    %967 = vmatprep.subr.mxu0 0.0
    %968 = vmatpush1.msra.mxu0 %v738
    %969 = vmatprep.subr.mxu0 0.0
    %970 = vmatpush1.msra.mxu0 %v737
    %971 = vmatprep.subr.mxu0 0.0
    %972 = vmatpush1.msra.mxu0 %v736
    %973 = vmatprep.subr.mxu0 0.0
    %974 = vmatpush2.msra.mxu0 0.0
    %975 = vmatprep.subr.mxu0 0.0
    %976 = vmatpush2.msra.mxu0 0.0
    %977 = vmatprep.subr.mxu0 0.0
    %978 = vmatpush2.msra.mxu0 0.0
    %979 = vmatprep.subr.mxu0 0.0
    %980 = vmatpush2.msra.mxu0 0.0
    %981 = vmatprep.subr.mxu0 0.0
    %982 = vmatpush2.msra.mxu0 0.0
    %983 = vmatprep.subr.mxu0 0.0
    %984 = vmatpush2.msra.mxu0 0.0
    %985 = vmatprep.subr.mxu0 0.0
    %986 = vmatpush2.msra.mxu0 0.0
    %987 = vmatprep.subr.mxu0 0.0
    %988 = vmatpush2.msra.mxu0 0.0
    %989 = vmatprep.subr.mxu0 0.0
    %990 = vmatpush2.msra.mxu0 0.0
    %991 = vmatprep.subr.mxu0 0.0
    %992 = vmatpush2.msra.mxu0 0.0
    %993 = vmatprep.subr.mxu0 0.0
    %994 = vmatpush2.msra.mxu0 0.0
    %995 = vmatprep.subr.mxu0 0.0
    %996 = vmatpush2.msra.mxu0 0.0
    %997 = vmatprep.subr.mxu0 0.0
    %998 = vmatpush2.msra.mxu0 0.0
    %999 = vmatprep.subr.mxu0 0.0
    %1000 = vmatpush2.msra.mxu0 0.0
    %1001 = vmatprep.subr.mxu0 0.0
    %1002 = vmatpush2.msra.mxu0 0.0
    %1003 = vmatprep.subr.mxu0 0.0
    %1004 = vmatpush2.msra.mxu0 0.0
    %1005 = vmatprep.mubr.f32.mxu0 0.0
    %1006 = vmatmul.mubr.f32.gmra.mxu0 %v750
    %v1007 = vpop.f32.mrf.mxu0
    %v1008 = vadd.f32 %v747, %v1007
    %v1009 = vpop.f32.mrf.mxu0
    %1010 = vmatprep.mubr.f32.mxu0 0.0
    %1011 = vmatmul.mubr.f32.gmra.mxu0 %v753
    %v1012 = vpop.f32.mrf.mxu0
    %v1013 = vadd.f32 %v747, %v1012
    %v1014 = vpop.f32.mrf.mxu0
    %1015 = vmatprep.mubr.f32.mxu0 0.0
    %1016 = vmatmul.mubr.f32.gmra.mxu0 %v756
    %v1017 = vpop.f32.mrf.mxu0
    %v1018 = vadd.f32 %v747, %v1017
    %v1019 = vpop.f32.mrf.mxu0
    %1020 = vmatprep.mubr.f32.mxu0 0.0
    %1021 = vmatmul.mubr.f32.gmra.mxu0 %v759
    %v1022 = vpop.f32.mrf.mxu0
    %v1023 = vadd.f32 %v747, %v1022
    %v1024 = vpop.f32.mrf.mxu0
    %1025 = vmatprep.mubr.f32.mxu0 0.0
    %1026 = vmatmul.mubr.f32.gmra.mxu0 %v762
    %v1027 = vpop.f32.mrf.mxu0
    %v1028 = vadd.f32 %v747, %v1027
    %v1029 = vpop.f32.mrf.mxu0
    %1030 = vmatprep.mubr.f32.mxu0 0.0
    %1031 = vmatmul.mubr.f32.gmra.mxu0 %v765
    %v1032 = vpop.f32.mrf.mxu0
    %v1033 = vadd.f32 %v747, %v1032
    %v1034 = vpop.f32.mrf.mxu0
    %1035 = vmatprep.mubr.f32.mxu0 0.0
    %1036 = vmatmul.mubr.f32.gmra.mxu0 %v768
    %v1037 = vpop.f32.mrf.mxu0
    %v1038 = vadd.f32 %v747, %v1037
    %v1039 = vpop.f32.mrf.mxu0
    %1040 = vmatprep.mubr.f32.mxu0 0.0
    %1041 = vmatmul.mubr.f32.gmra.mxu0 %v771
    %v1042 = vpop.f32.mrf.mxu0
    %v1043 = vadd.f32 %v747, %v1042
    %v1044 = vpop.f32.mrf.mxu0
    %1045 = vmatprep.mubr.f32.mxu0 0.0
    %1046 = vmatmul.mubr.f32.gmra.mxu0 %v774
    %v1047 = vpop.f32.mrf.mxu0
    %v1048 = vadd.f32 %v747, %v1047
    %v1049 = vpop.f32.mrf.mxu0
    %1050 = vmatprep.mubr.f32.mxu0 0.0
    %1051 = vmatmul.mubr.f32.gmra.mxu0 %v777
    %v1052 = vpop.f32.mrf.mxu0
    %v1053 = vadd.f32 %v747, %v1052
    %v1054 = vpop.f32.mrf.mxu0
    %1055 = vmatprep.mubr.f32.mxu0 0.0
    %1056 = vmatmul.mubr.f32.gmra.mxu0 %v780
    %v1057 = vpop.f32.mrf.mxu0
    %v1058 = vadd.f32 %v747, %v1057
    %v1059 = vpop.f32.mrf.mxu0
    %1060 = vmatprep.mubr.f32.mxu0 0.0
    %1061 = vmatmul.mubr.f32.gmra.mxu0 %v783
    %v1062 = vpop.f32.mrf.mxu0
    %v1063 = vadd.f32 %v747, %v1062
    %v1064 = vpop.f32.mrf.mxu0
    %1065 = vmatprep.mubr.f32.mxu0 0.0
    %1066 = vmatmul.mubr.f32.gmra.mxu0 %v786
    %v1067 = vpop.f32.mrf.mxu0
    %v1068 = vadd.f32 %v747, %v1067
    %v1069 = vpop.f32.mrf.mxu0
    %1070 = vmatprep.mubr.f32.mxu0 0.0
    %1071 = vmatmul.mubr.f32.gmra.mxu0 %v789
    %v1072 = vpop.f32.mrf.mxu0
    %v1073 = vadd.f32 %v747, %v1072
    %v1074 = vpop.f32.mrf.mxu0
    %1075 = vmatprep.mubr.f32.mxu0 0.0
    %1076 = vmatmul.mubr.f32.gmra.mxu0 %v792
    %v1077 = vpop.f32.mrf.mxu0
    %v1078 = vadd.f32 %v747, %v1077
    %v1079 = vpop.f32.mrf.mxu0
    %1080 = vmatprep.mubr.f32.mxu0 0.0
    %1081 = vmatmul.mubr.f32.gmra.mxu0 %v795
    %v1082 = vpop.f32.mrf.mxu0
    %v1083 = vadd.f32 %v747, %v1082
    %v1084 = vpop.f32.mrf.mxu0
    %1085 = vmatprep.mubr.f32.mxu0 0.0
    %1086 = vmatmul.mubr.f32.gmra.mxu0 %v798
    %v1087 = vpop.f32.mrf.mxu0
    %v1088 = vadd.f32 %v747, %v1087
    %v1089 = vpop.f32.mrf.mxu0
    %1090 = vmatprep.mubr.f32.mxu0 0.0
    %1091 = vmatmul.mubr.f32.gmra.mxu0 %v801
    %v1092 = vpop.f32.mrf.mxu0
    %v1093 = vadd.f32 %v747, %v1092
    %v1094 = vpop.f32.mrf.mxu0
    %1095 = vmatprep.mubr.f32.mxu0 0.0
    %1096 = vmatmul.mubr.f32.gmra.mxu0 %v804
    %v1097 = vpop.f32.mrf.mxu0
    %v1098 = vadd.f32 %v747, %v1097
    %v1099 = vpop.f32.mrf.mxu0
    %1100 = vmatprep.mubr.f32.mxu0 0.0
    %1101 = vmatmul.mubr.f32.gmra.mxu0 %v807
    %v1102 = vpop.f32.mrf.mxu0
    %v1103 = vadd.f32 %v747, %v1102
    %v1104 = vpop.f32.mrf.mxu0
    %1105 = vmatprep.mubr.f32.mxu0 0.0
    %1106 = vmatmul.mubr.f32.gmra.mxu0 %v810
    %v1107 = vpop.f32.mrf.mxu0
    %v1108 = vadd.f32 %v747, %v1107
    %v1109 = vpop.f32.mrf.mxu0
    %1110 = vmatprep.mubr.f32.mxu0 0.0
    %1111 = vmatmul.mubr.f32.gmra.mxu0 %v813
    %v1112 = vpop.f32.mrf.mxu0
    %v1113 = vadd.f32 %v747, %v1112
    %v1114 = vpop.f32.mrf.mxu0
    %1115 = vmatprep.mubr.f32.mxu0 0.0
    %1116 = vmatmul.mubr.f32.gmra.mxu0 %v816
    %v1117 = vpop.f32.mrf.mxu0
    %v1118 = vadd.f32 %v747, %v1117
    %v1119 = vpop.f32.mrf.mxu0
    %1120 = vmatprep.mubr.f32.mxu0 0.0
    %1121 = vmatmul.mubr.f32.gmra.mxu0 %v819
    %v1122 = vpop.f32.mrf.mxu0
    %v1123 = vadd.f32 %v747, %v1122
    %v1124 = vpop.f32.mrf.mxu0
    %1125 = vmatprep.mubr.f32.mxu0 0.0
    %1126 = vmatmul.mubr.f32.gmra.mxu0 %v822
    %v1127 = vpop.f32.mrf.mxu0
    %v1128 = vadd.f32 %v747, %v1127
    %v1129 = vpop.f32.mrf.mxu0
    %1130 = vmatprep.mubr.f32.mxu0 0.0
    %1131 = vmatmul.mubr.f32.gmra.mxu0 %v825
    %v1132 = vpop.f32.mrf.mxu0
    %v1133 = vadd.f32 %v747, %v1132
    %v1134 = vpop.f32.mrf.mxu0
    %1135 = vmatprep.mubr.f32.mxu0 0.0
    %1136 = vmatmul.mubr.f32.gmra.mxu0 %v828
    %v1137 = vpop.f32.mrf.mxu0
    %v1138 = vadd.f32 %v747, %v1137
    %v1139 = vpop.f32.mrf.mxu0
    %1140 = vmatprep.mubr.f32.mxu0 0.0
    %1141 = vmatmul.mubr.f32.gmra.mxu0 %v831
    %v1142 = vpop.f32.mrf.mxu0
    %v1143 = vadd.f32 %v747, %v1142
    %v1144 = vpop.f32.mrf.mxu0
    %1145 = vmatprep.mubr.f32.mxu0 0.0
    %1146 = vmatmul.mubr.f32.gmra.mxu0 %v834
    %v1147 = vpop.f32.mrf.mxu0
    %v1148 = vadd.f32 %v747, %v1147
    %v1149 = vpop.f32.mrf.mxu0
    %1150 = vmatprep.mubr.f32.mxu0 0.0
    %1151 = vmatmul.mubr.f32.gmra.mxu0 %v837
    %v1152 = vpop.f32.mrf.mxu0
    %v1153 = vadd.f32 %v747, %v1152
    %v1154 = vpop.f32.mrf.mxu0
    %1155 = vmatprep.mubr.f32.mxu0 0.0
    %1156 = vmatmul.mubr.f32.gmra.mxu0 %v840
    %v1157 = vpop.f32.mrf.mxu0
    %v1158 = vadd.f32 %v747, %v1157
    %v1159 = vpop.f32.mrf.mxu0
    %1160 = vmatprep.mubr.f32.mxu0 0.0
    %1161 = vmatmul.mubr.f32.gmra.mxu0 %v843
    %v1162 = vpop.f32.mrf.mxu0
    %v1163 = vadd.f32 %v747, %v1162
    %v1164 = vpop.f32.mrf.mxu0
    %1165 = vmatprep.mubr.f32.mxu0 0.0
    %1166 = vmatmul.mubr.f32.gmra.mxu0 %v846
    %v1167 = vpop.f32.mrf.mxu0
    %v1168 = vadd.f32 %v747, %v1167
    %v1169 = vpop.f32.mrf.mxu0
    %1170 = vmatprep.mubr.f32.mxu0 0.0
    %1171 = vmatmul.mubr.f32.gmra.mxu0 %v849
    %v1172 = vpop.f32.mrf.mxu0
    %v1173 = vadd.f32 %v747, %v1172
    %v1174 = vpop.f32.mrf.mxu0
    %1175 = vmatprep.mubr.f32.mxu0 0.0
    %1176 = vmatmul.mubr.f32.gmra.mxu0 %v852
    %v1177 = vpop.f32.mrf.mxu0
    %v1178 = vadd.f32 %v747, %v1177
    %v1179 = vpop.f32.mrf.mxu0
    %1180 = vmatprep.mubr.f32.mxu0 0.0
    %1181 = vmatmul.mubr.f32.gmra.mxu0 %v855
    %v1182 = vpop.f32.mrf.mxu0
    %v1183 = vadd.f32 %v747, %v1182
    %v1184 = vpop.f32.mrf.mxu0
    %1185 = vmatprep.mubr.f32.mxu0 0.0
    %1186 = vmatmul.mubr.f32.gmra.mxu0 %v858
    %v1187 = vpop.f32.mrf.mxu0
    %v1188 = vadd.f32 %v747, %v1187
    %v1189 = vpop.f32.mrf.mxu0
    %1190 = vmatprep.mubr.f32.mxu0 0.0
    %1191 = vmatmul.mubr.f32.gmra.mxu0 %v861
    %v1192 = vpop.f32.mrf.mxu0
    %v1193 = vadd.f32 %v747, %v1192
    %v1194 = vpop.f32.mrf.mxu0
    %1195 = vmatprep.mubr.f32.mxu0 0.0
    %1196 = vmatmul.mubr.f32.gmra.mxu0 %v864
    %v1197 = vpop.f32.mrf.mxu0
    %v1198 = vadd.f32 %v747, %v1197
    %v1199 = vpop.f32.mrf.mxu0
    %1200 = vmatprep.mubr.f32.mxu0 0.0
    %1201 = vmatmul.mubr.f32.gmra.mxu0 %v867
    %v1202 = vpop.f32.mrf.mxu0
    %v1203 = vadd.f32 %v747, %v1202
    %v1204 = vpop.f32.mrf.mxu0
    %1205 = vmatprep.mubr.f32.mxu0 0.0
    %1206 = vmatmul.mubr.f32.gmra.mxu0 %v870
    %v1207 = vpop.f32.mrf.mxu0
    %v1208 = vadd.f32 %v747, %v1207
    %v1209 = vpop.f32.mrf.mxu0
    %1210 = vmatprep.mubr.f32.mxu0 0.0
    %1211 = vmatmul.mubr.f32.gmra.mxu0 %v873
    %v1212 = vpop.f32.mrf.mxu0
    %v1213 = vadd.f32 %v747, %v1212
    %v1214 = vpop.f32.mrf.mxu0
    %1215 = vmatprep.mubr.f32.mxu0 0.0
    %1216 = vmatmul.mubr.f32.gmra.mxu0 %v876
    %v1217 = vpop.f32.mrf.mxu0
    %v1218 = vadd.f32 %v747, %v1217
    %v1219 = vpop.f32.mrf.mxu0
    %1220 = vmatprep.mubr.f32.mxu0 0.0
    %1221 = vmatmul.mubr.f32.gmra.mxu0 %v879
    %v1222 = vpop.f32.mrf.mxu0
    %v1223 = vadd.f32 %v747, %v1222
    %v1224 = vpop.f32.mrf.mxu0
    %1225 = vmatprep.mubr.f32.mxu0 0.0
    %1226 = vmatmul.mubr.f32.gmra.mxu0 %v882
    %v1227 = vpop.f32.mrf.mxu0
    %v1228 = vadd.f32 %v747, %v1227
    %v1229 = vpop.f32.mrf.mxu0
    %1230 = vmatprep.mubr.f32.mxu0 0.0
    %1231 = vmatmul.mubr.f32.gmra.mxu0 %v885
    %v1232 = vpop.f32.mrf.mxu0
    %v1233 = vadd.f32 %v747, %v1232
    %v1234 = vpop.f32.mrf.mxu0
    %1235 = vmatprep.mubr.f32.mxu0 0.0
    %1236 = vmatmul.mubr.f32.gmra.mxu0 %v888
    %v1237 = vpop.f32.mrf.mxu0
    %v1238 = vadd.f32 %v747, %v1237
    %v1239 = vpop.f32.mrf.mxu0
    %1240 = vmatprep.mubr.f32.mxu0 0.0
    %1241 = vmatmul.mubr.f32.gmra.mxu0 %v891
    %v1242 = vpop.f32.mrf.mxu0
    %v1243 = vadd.f32 %v747, %v1242
    %v1244 = vpop.f32.mrf.mxu0
    %1245 = vmatprep.mubr.f32.mxu0 0.0
    %1246 = vmatmul.mubr.f32.gmra.mxu0 %v894
    %v1247 = vpop.f32.mrf.mxu0
    %v1248 = vadd.f32 %v747, %v1247
    %v1249 = vpop.f32.mrf.mxu0
    %1250 = vmatprep.mubr.f32.mxu0 0.0
    %1251 = vmatmul.mubr.f32.gmra.mxu0 %v897
    %v1252 = vpop.f32.mrf.mxu0
    %v1253 = vadd.f32 %v747, %v1252
    %v1254 = vpop.f32.mrf.mxu0
    %1255 = vmatprep.mubr.f32.mxu0 0.0
    %1256 = vmatmul.mubr.f32.gmra.mxu0 %v900
    %v1257 = vpop.f32.mrf.mxu0
    %v1258 = vadd.f32 %v747, %v1257
    %v1259 = vpop.f32.mrf.mxu0
    %1260 = vmatprep.mubr.f32.mxu0 0.0
    %1261 = vmatmul.mubr.f32.gmra.mxu0 %v903
    %v1262 = vpop.f32.mrf.mxu0
    %v1263 = vadd.f32 %v747, %v1262
    %v1264 = vpop.f32.mrf.mxu0
    %1265 = vmatprep.mubr.f32.mxu0 0.0
    %1266 = vmatmul.mubr.f32.gmra.mxu0 %v906
    %v1267 = vpop.f32.mrf.mxu0
    %v1268 = vadd.f32 %v747, %v1267
    %v1269 = vpop.f32.mrf.mxu0
    %1270 = vmatprep.mubr.f32.mxu0 0.0
    %1271 = vmatmul.mubr.f32.gmra.mxu0 %v909
    %v1272 = vpop.f32.mrf.mxu0
    %v1273 = vadd.f32 %v747, %v1272
    %v1274 = vpop.f32.mrf.mxu0
    %1275 = vmatprep.mubr.f32.mxu0 0.0
    %1276 = vmatmul.mubr.f32.gmra.mxu0 %v912
    %v1277 = vpop.f32.mrf.mxu0
    %v1278 = vadd.f32 %v747, %v1277
    %v1279 = vpop.f32.mrf.mxu0
    %1280 = vmatprep.mubr.f32.mxu0 0.0
    %1281 = vmatmul.mubr.f32.gmra.mxu0 %v915
    %v1282 = vpop.f32.mrf.mxu0
    %v1283 = vadd.f32 %v747, %v1282
    %v1284 = vpop.f32.mrf.mxu0
    %1285 = vmatprep.mubr.f32.mxu0 0.0
    %1286 = vmatmul.mubr.f32.gmra.mxu0 %v918
    %v1287 = vpop.f32.mrf.mxu0
    %v1288 = vadd.f32 %v747, %v1287
    %v1289 = vpop.f32.mrf.mxu0
    %1290 = vmatprep.mubr.f32.mxu0 0.0
    %1291 = vmatmul.mubr.f32.gmra.mxu0 %v921
    %v1292 = vpop.f32.mrf.mxu0
    %v1293 = vadd.f32 %v747, %v1292
    %v1294 = vpop.f32.mrf.mxu0
    %1295 = vmatprep.mubr.f32.mxu0 0.0
    %1296 = vmatmul.mubr.f32.gmra.mxu0 %v924
    %v1297 = vpop.f32.mrf.mxu0
    %v1298 = vadd.f32 %v747, %v1297
    %v1299 = vpop.f32.mrf.mxu0
    %1300 = vmatprep.mubr.f32.mxu0 0.0
    %1301 = vmatmul.mubr.f32.gmra.mxu0 %v927
    %v1302 = vpop.f32.mrf.mxu0
    %v1303 = vadd.f32 %v747, %v1302
    %v1304 = vpop.f32.mrf.mxu0
    %1305 = vmatprep.mubr.f32.mxu0 0.0
    %1306 = vmatmul.mubr.f32.gmra.mxu0 %v930
    %v1307 = vpop.f32.mrf.mxu0
    %v1308 = vadd.f32 %v747, %v1307
    %v1309 = vpop.f32.mrf.mxu0
    %1310 = vmatprep.mubr.f32.mxu0 0.0
    %1311 = vmatmul.mubr.f32.gmra.mxu0 %v933
    %v1312 = vpop.f32.mrf.mxu0
    %v1313 = vadd.f32 %v747, %v1312
    %v1314 = vpop.f32.mrf.mxu0
    %1315 = vmatprep.mubr.f32.mxu0 0.0
    %1316 = vmatmul.mubr.f32.gmra.mxu0 %v936
    %v1317 = vpop.f32.mrf.mxu0
    %v1318 = vadd.f32 %v747, %v1317
    %v1319 = vpop.f32.mrf.mxu0
    %1320 = vmatprep.mubr.f32.mxu0 0.0
    %1321 = vmatmul.mubr.f32.gmra.mxu0 %v939
    %v1322 = vpop.f32.mrf.mxu0
    %v1323 = vadd.f32 %v747, %v1322
    %v1324 = vpop.f32.mrf.mxu0
    %1325 = vdwg.mxu0
    %v1326 = vmax.f32 %v1008, 0.0
    %v1327 = vmax.f32 %v1013, 0.0
    %v1328 = vmax.f32 %v1018, 0.0
    %v1329 = vmax.f32 %v1023, 0.0
    %v1330 = vmax.f32 %v1028, 0.0
    %v1331 = vmax.f32 %v1033, 0.0
    %v1332 = vmax.f32 %v1038, 0.0
    %v1333 = vmax.f32 %v1043, 0.0
    %v1334 = vmax.f32 %v1048, 0.0
    %v1335 = vmax.f32 %v1053, 0.0
    %v1336 = vmax.f32 %v1058, 0.0
    %v1337 = vmax.f32 %v1063, 0.0
    %v1338 = vmax.f32 %v1068, 0.0
    %v1339 = vmax.f32 %v1073, 0.0
    %v1340 = vmax.f32 %v1078, 0.0
    %v1341 = vmax.f32 %v1083, 0.0
    %v1342 = vmax.f32 %v1088, 0.0
    %v1343 = vmax.f32 %v1093, 0.0
    %v1344 = vmax.f32 %v1098, 0.0
    %v1345 = vmax.f32 %v1103, 0.0
    %v1346 = vmax.f32 %v1108, 0.0
    %v1347 = vmax.f32 %v1113, 0.0
    %v1348 = vmax.f32 %v1118, 0.0
    %v1349 = vmax.f32 %v1123, 0.0
    %v1350 = vmax.f32 %v1128, 0.0
    %v1351 = vmax.f32 %v1133, 0.0
    %v1352 = vmax.f32 %v1138, 0.0
    %v1353 = vmax.f32 %v1143, 0.0
    %v1354 = vmax.f32 %v1148, 0.0
    %v1355 = vmax.f32 %v1153, 0.0
    %v1356 = vmax.f32 %v1158, 0.0
    %v1357 = vmax.f32 %v1163, 0.0
    %v1358 = vmax.f32 %v1168, 0.0
    %v1359 = vmax.f32 %v1173, 0.0
    %v1360 = vmax.f32 %v1178, 0.0
    %v1361 = vmax.f32 %v1183, 0.0
    %v1362 = vmax.f32 %v1188, 0.0
    %v1363 = vmax.f32 %v1193, 0.0
    %v1364 = vmax.f32 %v1198, 0.0
    %v1365 = vmax.f32 %v1203, 0.0
    %v1366 = vmax.f32 %v1208, 0.0
    %v1367 = vmax.f32 %v1213, 0.0
    %v1368 = vmax.f32 %v1218, 0.0
    %v1369 = vmax.f32 %v1223, 0.0
    %v1370 = vmax.f32 %v1228, 0.0
    %v1371 = vmax.f32 %v1233, 0.0
    %v1372 = vmax.f32 %v1238, 0.0
    %v1373 = vmax.f32 %v1243, 0.0
    %v1374 = vmax.f32 %v1248, 0.0
    %v1375 = vmax.f32 %v1253, 0.0
    %v1376 = vmax.f32 %v1258, 0.0
    %v1377 = vmax.f32 %v1263, 0.0
    %v1378 = vmax.f32 %v1268, 0.0
    %v1379 = vmax.f32 %v1273, 0.0
    %v1380 = vmax.f32 %v1278, 0.0
    %v1381 = vmax.f32 %v1283, 0.0
    %v1382 = vmax.f32 %v1288, 0.0
    %v1383 = vmax.f32 %v1293, 0.0
    %v1384 = vmax.f32 %v1298, 0.0
    %v1385 = vmax.f32 %v1303, 0.0
    %v1386 = vmax.f32 %v1308, 0.0
    %v1387 = vmax.f32 %v1313, 0.0
    %v1388 = vmax.f32 %v1318, 0.0
    %v1389 = vmax.f32 %v1323, 0.0
    %v1390 = vld [vmem:[%s3] sm:$0xff]
    %v1391 = vld [vmem:[%s3 + $0x8] sm:$0xff]
    %v1392 = vld [vmem:[%s3 + $0x10] sm:$0xff]
    %v1393 = vld [vmem:[%s3 + $0x18] sm:$0xff]
    %v1394 = vld [vmem:[%s3 + $0x20] sm:$0xff]
    %v1395 = vld [vmem:[%s3 + $0x28] sm:$0xff]
    %v1396 = vld [vmem:[%s3 + $0x30] sm:$0xff]
    %v1397 = vld [vmem:[%s3 + $0x38] sm:$0xff]
    %v1398 = vlaneseq
    %v1399 = vshrl.u32 %v1398, 7
    %v1400 = vsub.s32 2, %v1399
    %v1401 = vrot.slane %v21, %v1400
    %v1403 = vsel %vm748, %v1326, 0
    %v1406 = vsel %vm748, %v1327, 0
    %v1409 = vsel %vm748, %v1328, 0
    %v1412 = vsel %vm748, %v1329, 0
    %v1415 = vsel %vm748, %v1330, 0
    %v1418 = vsel %vm748, %v1331, 0
    %v1421 = vsel %vm748, %v1332, 0
    %v1424 = vsel %vm748, %v1333, 0
    %v1427 = vsel %vm748, %v1334, 0
    %v1430 = vsel %vm748, %v1335, 0
    %v1433 = vsel %vm748, %v1336, 0
    %v1436 = vsel %vm748, %v1337, 0
    %v1439 = vsel %vm748, %v1338, 0
    %v1442 = vsel %vm748, %v1339, 0
    %v1445 = vsel %vm748, %v1340, 0
    %v1448 = vsel %vm748, %v1341, 0
    %v1451 = vsel %vm748, %v1342, 0
    %v1454 = vsel %vm748, %v1343, 0
    %v1457 = vsel %vm748, %v1344, 0
    %v1460 = vsel %vm748, %v1345, 0
    %v1463 = vsel %vm748, %v1346, 0
    %v1466 = vsel %vm748, %v1347, 0
    %v1469 = vsel %vm748, %v1348, 0
    %v1472 = vsel %vm748, %v1349, 0
    %v1475 = vsel %vm748, %v1350, 0
    %v1478 = vsel %vm748, %v1351, 0
    %v1481 = vsel %vm748, %v1352, 0
    %v1484 = vsel %vm748, %v1353, 0
    %v1487 = vsel %vm748, %v1354, 0
    %v1490 = vsel %vm748, %v1355, 0
    %v1493 = vsel %vm748, %v1356, 0
    %v1496 = vsel %vm748, %v1357, 0
    %v1499 = vsel %vm748, %v1358, 0
    %v1502 = vsel %vm748, %v1359, 0
    %v1505 = vsel %vm748, %v1360, 0
    %v1508 = vsel %vm748, %v1361, 0
    %v1511 = vsel %vm748, %v1362, 0
    %v1514 = vsel %vm748, %v1363, 0
    %v1517 = vsel %vm748, %v1364, 0
    %v1520 = vsel %vm748, %v1365, 0
    %v1523 = vsel %vm748, %v1366, 0
    %v1526 = vsel %vm748, %v1367, 0
    %v1529 = vsel %vm748, %v1368, 0
    %v1532 = vsel %vm748, %v1369, 0
    %v1535 = vsel %vm748, %v1370, 0
    %v1538 = vsel %vm748, %v1371, 0
    %v1541 = vsel %vm748, %v1372, 0
    %v1544 = vsel %vm748, %v1373, 0
    %v1547 = vsel %vm748, %v1374, 0
    %v1550 = vsel %vm748, %v1375, 0
    %v1553 = vsel %vm748, %v1376, 0
    %v1556 = vsel %vm748, %v1377, 0
    %v1559 = vsel %vm748, %v1378, 0
    %v1562 = vsel %vm748, %v1379, 0
    %v1565 = vsel %vm748, %v1380, 0
    %v1568 = vsel %vm748, %v1381, 0
    %v1571 = vsel %vm748, %v1382, 0
    %v1574 = vsel %vm748, %v1383, 0
    %v1577 = vsel %vm748, %v1384, 0
    %v1580 = vsel %vm748, %v1385, 0
    %v1583 = vsel %vm748, %v1386, 0
    %v1586 = vsel %vm748, %v1387, 0
    %v1589 = vsel %vm748, %v1388, 0
    %v1592 = vsel %vm748, %v1389, 0
    %1594 = vmatprep.subr.mxu0 0.0
    %1595 = vmatpush1.msra.mxu0 0.0
    %1596 = vmatprep.subr.mxu0 0.0
    %1597 = vmatpush1.msra.mxu0 0.0
    %1598 = vmatprep.subr.mxu0 0.0
    %1599 = vmatpush1.msra.mxu0 0.0
    %1600 = vmatprep.subr.mxu0 0.0
    %1601 = vmatpush1.msra.mxu0 0.0
    %1602 = vmatprep.subr.mxu0 0.0
    %1603 = vmatpush1.msra.mxu0 0.0
    %1604 = vmatprep.subr.mxu0 0.0
    %1605 = vmatpush1.msra.mxu0 0.0
    %1606 = vmatprep.subr.mxu0 0.0
    %1607 = vmatpush1.msra.mxu0 0.0
    %1608 = vmatprep.subr.mxu0 0.0
    %1609 = vmatpush1.msra.mxu0 0.0
    %1610 = vmatprep.subr.mxu0 0.0
    %1611 = vmatpush1.msra.mxu0 %v1397
    %1612 = vmatprep.subr.mxu0 0.0
    %1613 = vmatpush1.msra.mxu0 %v1396
    %1614 = vmatprep.subr.mxu0 0.0
    %1615 = vmatpush1.msra.mxu0 %v1395
    %1616 = vmatprep.subr.mxu0 0.0
    %1617 = vmatpush1.msra.mxu0 %v1394
    %1618 = vmatprep.subr.mxu0 0.0
    %1619 = vmatpush1.msra.mxu0 %v1393
    %1620 = vmatprep.subr.mxu0 0.0
    %1621 = vmatpush1.msra.mxu0 %v1392
    %1622 = vmatprep.subr.mxu0 0.0
    %1623 = vmatpush1.msra.mxu0 %v1391
    %1624 = vmatprep.subr.mxu0 0.0
    %1625 = vmatpush1.msra.mxu0 %v1390
    %1626 = vmatprep.subr.mxu0 0.0
    %1627 = vmatpush2.msra.mxu0 0.0
    %1628 = vmatprep.subr.mxu0 0.0
    %1629 = vmatpush2.msra.mxu0 0.0
    %1630 = vmatprep.subr.mxu0 0.0
    %1631 = vmatpush2.msra.mxu0 0.0
    %1632 = vmatprep.subr.mxu0 0.0
    %1633 = vmatpush2.msra.mxu0 0.0
    %1634 = vmatprep.subr.mxu0 0.0
    %1635 = vmatpush2.msra.mxu0 0.0
    %1636 = vmatprep.subr.mxu0 0.0
    %1637 = vmatpush2.msra.mxu0 0.0
    %1638 = vmatprep.subr.mxu0 0.0
    %1639 = vmatpush2.msra.mxu0 0.0
    %1640 = vmatprep.subr.mxu0 0.0
    %1641 = vmatpush2.msra.mxu0 0.0
    %1642 = vmatprep.subr.mxu0 0.0
    %1643 = vmatpush2.msra.mxu0 0.0
    %1644 = vmatprep.subr.mxu0 0.0
    %1645 = vmatpush2.msra.mxu0 0.0
    %1646 = vmatprep.subr.mxu0 0.0
    %1647 = vmatpush2.msra.mxu0 0.0
    %1648 = vmatprep.subr.mxu0 0.0
    %1649 = vmatpush2.msra.mxu0 0.0
    %1650 = vmatprep.subr.mxu0 0.0
    %1651 = vmatpush2.msra.mxu0 0.0
    %1652 = vmatprep.subr.mxu0 0.0
    %1653 = vmatpush2.msra.mxu0 0.0
    %1654 = vmatprep.subr.mxu0 0.0
    %1655 = vmatpush2.msra.mxu0 0.0
    %1656 = vmatprep.subr.mxu0 0.0
    %1657 = vmatpush2.msra.mxu0 0.0
    %1658 = vmatprep.mubr.f32.mxu0 0.0
    %1659 = vmatmul.mubr.f32.gmra.mxu0 %v1403
    %v1660 = vpop.f32.mrf.mxu0
    %v1661 = vadd.f32 %v1401, %v1660
    %v1662 = vpop.f32.mrf.mxu0
    %1663 = vmatprep.mubr.f32.mxu0 0.0
    %1664 = vmatmul.mubr.f32.gmra.mxu0 %v1406
    %v1665 = vpop.f32.mrf.mxu0
    %v1666 = vadd.f32 %v1401, %v1665
    %v1667 = vpop.f32.mrf.mxu0
    %1668 = vmatprep.mubr.f32.mxu0 0.0
    %1669 = vmatmul.mubr.f32.gmra.mxu0 %v1409
    %v1670 = vpop.f32.mrf.mxu0
    %v1671 = vadd.f32 %v1401, %v1670
    %v1672 = vpop.f32.mrf.mxu0
    %1673 = vmatprep.mubr.f32.mxu0 0.0
    %1674 = vmatmul.mubr.f32.gmra.mxu0 %v1412
    %v1675 = vpop.f32.mrf.mxu0
    %v1676 = vadd.f32 %v1401, %v1675
    %v1677 = vpop.f32.mrf.mxu0
    %1678 = vmatprep.mubr.f32.mxu0 0.0
    %1679 = vmatmul.mubr.f32.gmra.mxu0 %v1415
    %v1680 = vpop.f32.mrf.mxu0
    %v1681 = vadd.f32 %v1401, %v1680
    %v1682 = vpop.f32.mrf.mxu0
    %1683 = vmatprep.mubr.f32.mxu0 0.0
    %1684 = vmatmul.mubr.f32.gmra.mxu0 %v1418
    %v1685 = vpop.f32.mrf.mxu0
    %v1686 = vadd.f32 %v1401, %v1685
    %v1687 = vpop.f32.mrf.mxu0
    %1688 = vmatprep.mubr.f32.mxu0 0.0
    %1689 = vmatmul.mubr.f32.gmra.mxu0 %v1421
    %v1690 = vpop.f32.mrf.mxu0
    %v1691 = vadd.f32 %v1401, %v1690
    %v1692 = vpop.f32.mrf.mxu0
    %1693 = vmatprep.mubr.f32.mxu0 0.0
    %1694 = vmatmul.mubr.f32.gmra.mxu0 %v1424
    %v1695 = vpop.f32.mrf.mxu0
    %v1696 = vadd.f32 %v1401, %v1695
    %v1697 = vpop.f32.mrf.mxu0
    %1698 = vmatprep.mubr.f32.mxu0 0.0
    %1699 = vmatmul.mubr.f32.gmra.mxu0 %v1427
    %v1700 = vpop.f32.mrf.mxu0
    %v1701 = vadd.f32 %v1401, %v1700
    %v1702 = vpop.f32.mrf.mxu0
    %1703 = vmatprep.mubr.f32.mxu0 0.0
    %1704 = vmatmul.mubr.f32.gmra.mxu0 %v1430
    %v1705 = vpop.f32.mrf.mxu0
    %v1706 = vadd.f32 %v1401, %v1705
    %v1707 = vpop.f32.mrf.mxu0
    %1708 = vmatprep.mubr.f32.mxu0 0.0
    %1709 = vmatmul.mubr.f32.gmra.mxu0 %v1433
    %v1710 = vpop.f32.mrf.mxu0
    %v1711 = vadd.f32 %v1401, %v1710
    %v1712 = vpop.f32.mrf.mxu0
    %1713 = vmatprep.mubr.f32.mxu0 0.0
    %1714 = vmatmul.mubr.f32.gmra.mxu0 %v1436
    %v1715 = vpop.f32.mrf.mxu0
    %v1716 = vadd.f32 %v1401, %v1715
    %v1717 = vpop.f32.mrf.mxu0
    %1718 = vmatprep.mubr.f32.mxu0 0.0
    %1719 = vmatmul.mubr.f32.gmra.mxu0 %v1439
    %v1720 = vpop.f32.mrf.mxu0
    %v1721 = vadd.f32 %v1401, %v1720
    %v1722 = vpop.f32.mrf.mxu0
    %1723 = vmatprep.mubr.f32.mxu0 0.0
    %1724 = vmatmul.mubr.f32.gmra.mxu0 %v1442
    %v1725 = vpop.f32.mrf.mxu0
    %v1726 = vadd.f32 %v1401, %v1725
    %v1727 = vpop.f32.mrf.mxu0
    %1728 = vmatprep.mubr.f32.mxu0 0.0
    %1729 = vmatmul.mubr.f32.gmra.mxu0 %v1445
    %v1730 = vpop.f32.mrf.mxu0
    %v1731 = vadd.f32 %v1401, %v1730
    %v1732 = vpop.f32.mrf.mxu0
    %1733 = vmatprep.mubr.f32.mxu0 0.0
    %1734 = vmatmul.mubr.f32.gmra.mxu0 %v1448
    %v1735 = vpop.f32.mrf.mxu0
    %v1736 = vadd.f32 %v1401, %v1735
    %v1737 = vpop.f32.mrf.mxu0
    %1738 = vmatprep.mubr.f32.mxu0 0.0
    %1739 = vmatmul.mubr.f32.gmra.mxu0 %v1451
    %v1740 = vpop.f32.mrf.mxu0
    %v1741 = vadd.f32 %v1401, %v1740
    %v1742 = vpop.f32.mrf.mxu0
    %1743 = vmatprep.mubr.f32.mxu0 0.0
    %1744 = vmatmul.mubr.f32.gmra.mxu0 %v1454
    %v1745 = vpop.f32.mrf.mxu0
    %v1746 = vadd.f32 %v1401, %v1745
    %v1747 = vpop.f32.mrf.mxu0
    %1748 = vmatprep.mubr.f32.mxu0 0.0
    %1749 = vmatmul.mubr.f32.gmra.mxu0 %v1457
    %v1750 = vpop.f32.mrf.mxu0
    %v1751 = vadd.f32 %v1401, %v1750
    %v1752 = vpop.f32.mrf.mxu0
    %1753 = vmatprep.mubr.f32.mxu0 0.0
    %1754 = vmatmul.mubr.f32.gmra.mxu0 %v1460
    %v1755 = vpop.f32.mrf.mxu0
    %v1756 = vadd.f32 %v1401, %v1755
    %v1757 = vpop.f32.mrf.mxu0
    %1758 = vmatprep.mubr.f32.mxu0 0.0
    %1759 = vmatmul.mubr.f32.gmra.mxu0 %v1463
    %v1760 = vpop.f32.mrf.mxu0
    %v1761 = vadd.f32 %v1401, %v1760
    %v1762 = vpop.f32.mrf.mxu0
    %1763 = vmatprep.mubr.f32.mxu0 0.0
    %1764 = vmatmul.mubr.f32.gmra.mxu0 %v1466
    %v1765 = vpop.f32.mrf.mxu0
    %v1766 = vadd.f32 %v1401, %v1765
    %v1767 = vpop.f32.mrf.mxu0
    %1768 = vmatprep.mubr.f32.mxu0 0.0
    %1769 = vmatmul.mubr.f32.gmra.mxu0 %v1469
    %v1770 = vpop.f32.mrf.mxu0
    %v1771 = vadd.f32 %v1401, %v1770
    %v1772 = vpop.f32.mrf.mxu0
    %1773 = vmatprep.mubr.f32.mxu0 0.0
    %1774 = vmatmul.mubr.f32.gmra.mxu0 %v1472
    %v1775 = vpop.f32.mrf.mxu0
    %v1776 = vadd.f32 %v1401, %v1775
    %v1777 = vpop.f32.mrf.mxu0
    %1778 = vmatprep.mubr.f32.mxu0 0.0
    %1779 = vmatmul.mubr.f32.gmra.mxu0 %v1475
    %v1780 = vpop.f32.mrf.mxu0
    %v1781 = vadd.f32 %v1401, %v1780
    %v1782 = vpop.f32.mrf.mxu0
    %1783 = vmatprep.mubr.f32.mxu0 0.0
    %1784 = vmatmul.mubr.f32.gmra.mxu0 %v1478
    %v1785 = vpop.f32.mrf.mxu0
    %v1786 = vadd.f32 %v1401, %v1785
    %v1787 = vpop.f32.mrf.mxu0
    %1788 = vmatprep.mubr.f32.mxu0 0.0
    %1789 = vmatmul.mubr.f32.gmra.mxu0 %v1481
    %v1790 = vpop.f32.mrf.mxu0
    %v1791 = vadd.f32 %v1401, %v1790
    %v1792 = vpop.f32.mrf.mxu0
    %1793 = vmatprep.mubr.f32.mxu0 0.0
    %1794 = vmatmul.mubr.f32.gmra.mxu0 %v1484
    %v1795 = vpop.f32.mrf.mxu0
    %v1796 = vadd.f32 %v1401, %v1795
    %v1797 = vpop.f32.mrf.mxu0
    %1798 = vmatprep.mubr.f32.mxu0 0.0
    %1799 = vmatmul.mubr.f32.gmra.mxu0 %v1487
    %v1800 = vpop.f32.mrf.mxu0
    %v1801 = vadd.f32 %v1401, %v1800
    %v1802 = vpop.f32.mrf.mxu0
    %1803 = vmatprep.mubr.f32.mxu0 0.0
    %1804 = vmatmul.mubr.f32.gmra.mxu0 %v1490
    %v1805 = vpop.f32.mrf.mxu0
    %v1806 = vadd.f32 %v1401, %v1805
    %v1807 = vpop.f32.mrf.mxu0
    %1808 = vmatprep.mubr.f32.mxu0 0.0
    %1809 = vmatmul.mubr.f32.gmra.mxu0 %v1493
    %v1810 = vpop.f32.mrf.mxu0
    %v1811 = vadd.f32 %v1401, %v1810
    %v1812 = vpop.f32.mrf.mxu0
    %1813 = vmatprep.mubr.f32.mxu0 0.0
    %1814 = vmatmul.mubr.f32.gmra.mxu0 %v1496
    %v1815 = vpop.f32.mrf.mxu0
    %v1816 = vadd.f32 %v1401, %v1815
    %v1817 = vpop.f32.mrf.mxu0
    %1818 = vmatprep.mubr.f32.mxu0 0.0
    %1819 = vmatmul.mubr.f32.gmra.mxu0 %v1499
    %v1820 = vpop.f32.mrf.mxu0
    %v1821 = vadd.f32 %v1401, %v1820
    %v1822 = vpop.f32.mrf.mxu0
    %1823 = vmatprep.mubr.f32.mxu0 0.0
    %1824 = vmatmul.mubr.f32.gmra.mxu0 %v1502
    %v1825 = vpop.f32.mrf.mxu0
    %v1826 = vadd.f32 %v1401, %v1825
    %v1827 = vpop.f32.mrf.mxu0
    %1828 = vmatprep.mubr.f32.mxu0 0.0
    %1829 = vmatmul.mubr.f32.gmra.mxu0 %v1505
    %v1830 = vpop.f32.mrf.mxu0
    %v1831 = vadd.f32 %v1401, %v1830
    %v1832 = vpop.f32.mrf.mxu0
    %1833 = vmatprep.mubr.f32.mxu0 0.0
    %1834 = vmatmul.mubr.f32.gmra.mxu0 %v1508
    %v1835 = vpop.f32.mrf.mxu0
    %v1836 = vadd.f32 %v1401, %v1835
    %v1837 = vpop.f32.mrf.mxu0
    %1838 = vmatprep.mubr.f32.mxu0 0.0
    %1839 = vmatmul.mubr.f32.gmra.mxu0 %v1511
    %v1840 = vpop.f32.mrf.mxu0
    %v1841 = vadd.f32 %v1401, %v1840
    %v1842 = vpop.f32.mrf.mxu0
    %1843 = vmatprep.mubr.f32.mxu0 0.0
    %1844 = vmatmul.mubr.f32.gmra.mxu0 %v1514
    %v1845 = vpop.f32.mrf.mxu0
    %v1846 = vadd.f32 %v1401, %v1845
    %v1847 = vpop.f32.mrf.mxu0
    %1848 = vmatprep.mubr.f32.mxu0 0.0
    %1849 = vmatmul.mubr.f32.gmra.mxu0 %v1517
    %v1850 = vpop.f32.mrf.mxu0
    %v1851 = vadd.f32 %v1401, %v1850
    %v1852 = vpop.f32.mrf.mxu0
    %1853 = vmatprep.mubr.f32.mxu0 0.0
    %1854 = vmatmul.mubr.f32.gmra.mxu0 %v1520
    %v1855 = vpop.f32.mrf.mxu0
    %v1856 = vadd.f32 %v1401, %v1855
    %v1857 = vpop.f32.mrf.mxu0
    %1858 = vmatprep.mubr.f32.mxu0 0.0
    %1859 = vmatmul.mubr.f32.gmra.mxu0 %v1523
    %v1860 = vpop.f32.mrf.mxu0
    %v1861 = vadd.f32 %v1401, %v1860
    %v1862 = vpop.f32.mrf.mxu0
    %1863 = vmatprep.mubr.f32.mxu0 0.0
    %1864 = vmatmul.mubr.f32.gmra.mxu0 %v1526
    %v1865 = vpop.f32.mrf.mxu0
    %v1866 = vadd.f32 %v1401, %v1865
    %v1867 = vpop.f32.mrf.mxu0
    %1868 = vmatprep.mubr.f32.mxu0 0.0
    %1869 = vmatmul.mubr.f32.gmra.mxu0 %v1529
    %v1870 = vpop.f32.mrf.mxu0
    %v1871 = vadd.f32 %v1401, %v1870
    %v1872 = vpop.f32.mrf.mxu0
    %1873 = vmatprep.mubr.f32.mxu0 0.0
    %1874 = vmatmul.mubr.f32.gmra.mxu0 %v1532
    %v1875 = vpop.f32.mrf.mxu0
    %v1876 = vadd.f32 %v1401, %v1875
    %v1877 = vpop.f32.mrf.mxu0
    %1878 = vmatprep.mubr.f32.mxu0 0.0
    %1879 = vmatmul.mubr.f32.gmra.mxu0 %v1535
    %v1880 = vpop.f32.mrf.mxu0
    %v1881 = vadd.f32 %v1401, %v1880
    %v1882 = vpop.f32.mrf.mxu0
    %1883 = vmatprep.mubr.f32.mxu0 0.0
    %1884 = vmatmul.mubr.f32.gmra.mxu0 %v1538
    %v1885 = vpop.f32.mrf.mxu0
    %v1886 = vadd.f32 %v1401, %v1885
    %v1887 = vpop.f32.mrf.mxu0
    %1888 = vmatprep.mubr.f32.mxu0 0.0
    %1889 = vmatmul.mubr.f32.gmra.mxu0 %v1541
    %v1890 = vpop.f32.mrf.mxu0
    %v1891 = vadd.f32 %v1401, %v1890
    %v1892 = vpop.f32.mrf.mxu0
    %1893 = vmatprep.mubr.f32.mxu0 0.0
    %1894 = vmatmul.mubr.f32.gmra.mxu0 %v1544
    %v1895 = vpop.f32.mrf.mxu0
    %v1896 = vadd.f32 %v1401, %v1895
    %v1897 = vpop.f32.mrf.mxu0
    %1898 = vmatprep.mubr.f32.mxu0 0.0
    %1899 = vmatmul.mubr.f32.gmra.mxu0 %v1547
    %v1900 = vpop.f32.mrf.mxu0
    %v1901 = vadd.f32 %v1401, %v1900
    %v1902 = vpop.f32.mrf.mxu0
    %1903 = vmatprep.mubr.f32.mxu0 0.0
    %1904 = vmatmul.mubr.f32.gmra.mxu0 %v1550
    %v1905 = vpop.f32.mrf.mxu0
    %v1906 = vadd.f32 %v1401, %v1905
    %v1907 = vpop.f32.mrf.mxu0
    %1908 = vmatprep.mubr.f32.mxu0 0.0
    %1909 = vmatmul.mubr.f32.gmra.mxu0 %v1553
    %v1910 = vpop.f32.mrf.mxu0
    %v1911 = vadd.f32 %v1401, %v1910
    %v1912 = vpop.f32.mrf.mxu0
    %1913 = vmatprep.mubr.f32.mxu0 0.0
    %1914 = vmatmul.mubr.f32.gmra.mxu0 %v1556
    %v1915 = vpop.f32.mrf.mxu0
    %v1916 = vadd.f32 %v1401, %v1915
    %v1917 = vpop.f32.mrf.mxu0
    %1918 = vmatprep.mubr.f32.mxu0 0.0
    %1919 = vmatmul.mubr.f32.gmra.mxu0 %v1559
    %v1920 = vpop.f32.mrf.mxu0
    %v1921 = vadd.f32 %v1401, %v1920
    %v1922 = vpop.f32.mrf.mxu0
    %1923 = vmatprep.mubr.f32.mxu0 0.0
    %1924 = vmatmul.mubr.f32.gmra.mxu0 %v1562
    %v1925 = vpop.f32.mrf.mxu0
    %v1926 = vadd.f32 %v1401, %v1925
    %v1927 = vpop.f32.mrf.mxu0
    %1928 = vmatprep.mubr.f32.mxu0 0.0
    %1929 = vmatmul.mubr.f32.gmra.mxu0 %v1565
    %v1930 = vpop.f32.mrf.mxu0
    %v1931 = vadd.f32 %v1401, %v1930
    %v1932 = vpop.f32.mrf.mxu0
    %1933 = vmatprep.mubr.f32.mxu0 0.0
    %1934 = vmatmul.mubr.f32.gmra.mxu0 %v1568
    %v1935 = vpop.f32.mrf.mxu0
    %v1936 = vadd.f32 %v1401, %v1935
    %v1937 = vpop.f32.mrf.mxu0
    %1938 = vmatprep.mubr.f32.mxu0 0.0
    %1939 = vmatmul.mubr.f32.gmra.mxu0 %v1571
    %v1940 = vpop.f32.mrf.mxu0
    %v1941 = vadd.f32 %v1401, %v1940
    %v1942 = vpop.f32.mrf.mxu0
    %1943 = vmatprep.mubr.f32.mxu0 0.0
    %1944 = vmatmul.mubr.f32.gmra.mxu0 %v1574
    %v1945 = vpop.f32.mrf.mxu0
    %v1946 = vadd.f32 %v1401, %v1945
    %v1947 = vpop.f32.mrf.mxu0
    %1948 = vmatprep.mubr.f32.mxu0 0.0
    %1949 = vmatmul.mubr.f32.gmra.mxu0 %v1577
    %v1950 = vpop.f32.mrf.mxu0
    %v1951 = vadd.f32 %v1401, %v1950
    %v1952 = vpop.f32.mrf.mxu0
    %1953 = vmatprep.mubr.f32.mxu0 0.0
    %1954 = vmatmul.mubr.f32.gmra.mxu0 %v1580
    %v1955 = vpop.f32.mrf.mxu0
    %v1956 = vadd.f32 %v1401, %v1955
    %v1957 = vpop.f32.mrf.mxu0
    %1958 = vmatprep.mubr.f32.mxu0 0.0
    %1959 = vmatmul.mubr.f32.gmra.mxu0 %v1583
    %v1960 = vpop.f32.mrf.mxu0
    %v1961 = vadd.f32 %v1401, %v1960
    %v1962 = vpop.f32.mrf.mxu0
    %1963 = vmatprep.mubr.f32.mxu0 0.0
    %1964 = vmatmul.mubr.f32.gmra.mxu0 %v1586
    %v1965 = vpop.f32.mrf.mxu0
    %v1966 = vadd.f32 %v1401, %v1965
    %v1967 = vpop.f32.mrf.mxu0
    %1968 = vmatprep.mubr.f32.mxu0 0.0
    %1969 = vmatmul.mubr.f32.gmra.mxu0 %v1589
    %v1970 = vpop.f32.mrf.mxu0
    %v1971 = vadd.f32 %v1401, %v1970
    %v1972 = vpop.f32.mrf.mxu0
    %1973 = vmatprep.mubr.f32.mxu0 0.0
    %1974 = vmatmul.mubr.f32.gmra.mxu0 %v1592
    %v1975 = vpop.f32.mrf.mxu0
    %v1976 = vadd.f32 %v1401, %v1975
    %v1977 = vpop.f32.mrf.mxu0
    %1978 = vdwg.mxu0
    %v1979 = vmax.f32 %v1661, 0.0
    %v1980 = vmax.f32 %v1666, 0.0
    %v1981 = vmax.f32 %v1671, 0.0
    %v1982 = vmax.f32 %v1676, 0.0
    %v1983 = vmax.f32 %v1681, 0.0
    %v1984 = vmax.f32 %v1686, 0.0
    %v1985 = vmax.f32 %v1691, 0.0
    %v1986 = vmax.f32 %v1696, 0.0
    %v1987 = vmax.f32 %v1701, 0.0
    %v1988 = vmax.f32 %v1706, 0.0
    %v1989 = vmax.f32 %v1711, 0.0
    %v1990 = vmax.f32 %v1716, 0.0
    %v1991 = vmax.f32 %v1721, 0.0
    %v1992 = vmax.f32 %v1726, 0.0
    %v1993 = vmax.f32 %v1731, 0.0
    %v1994 = vmax.f32 %v1736, 0.0
    %v1995 = vmax.f32 %v1741, 0.0
    %v1996 = vmax.f32 %v1746, 0.0
    %v1997 = vmax.f32 %v1751, 0.0
    %v1998 = vmax.f32 %v1756, 0.0
    %v1999 = vmax.f32 %v1761, 0.0
    %v2000 = vmax.f32 %v1766, 0.0
    %v2001 = vmax.f32 %v1771, 0.0
    %v2002 = vmax.f32 %v1776, 0.0
    %v2003 = vmax.f32 %v1781, 0.0
    %v2004 = vmax.f32 %v1786, 0.0
    %v2005 = vmax.f32 %v1791, 0.0
    %v2006 = vmax.f32 %v1796, 0.0
    %v2007 = vmax.f32 %v1801, 0.0
    %v2008 = vmax.f32 %v1806, 0.0
    %v2009 = vmax.f32 %v1811, 0.0
    %v2010 = vmax.f32 %v1816, 0.0
    %v2011 = vmax.f32 %v1821, 0.0
    %v2012 = vmax.f32 %v1826, 0.0
    %v2013 = vmax.f32 %v1831, 0.0
    %v2014 = vmax.f32 %v1836, 0.0
    %v2015 = vmax.f32 %v1841, 0.0
    %v2016 = vmax.f32 %v1846, 0.0
    %v2017 = vmax.f32 %v1851, 0.0
    %v2018 = vmax.f32 %v1856, 0.0
    %v2019 = vmax.f32 %v1861, 0.0
    %v2020 = vmax.f32 %v1866, 0.0
    %v2021 = vmax.f32 %v1871, 0.0
    %v2022 = vmax.f32 %v1876, 0.0
    %v2023 = vmax.f32 %v1881, 0.0
    %v2024 = vmax.f32 %v1886, 0.0
    %v2025 = vmax.f32 %v1891, 0.0
    %v2026 = vmax.f32 %v1896, 0.0
    %v2027 = vmax.f32 %v1901, 0.0
    %v2028 = vmax.f32 %v1906, 0.0
    %v2029 = vmax.f32 %v1911, 0.0
    %v2030 = vmax.f32 %v1916, 0.0
    %v2031 = vmax.f32 %v1921, 0.0
    %v2032 = vmax.f32 %v1926, 0.0
    %v2033 = vmax.f32 %v1931, 0.0
    %v2034 = vmax.f32 %v1936, 0.0
    %v2035 = vmax.f32 %v1941, 0.0
    %v2036 = vmax.f32 %v1946, 0.0
    %v2037 = vmax.f32 %v1951, 0.0
    %v2038 = vmax.f32 %v1956, 0.0
    %v2039 = vmax.f32 %v1961, 0.0
    %v2040 = vmax.f32 %v1966, 0.0
    %v2041 = vmax.f32 %v1971, 0.0
    %v2042 = vmax.f32 %v1976, 0.0
    %v2044 = vrot.slane %v21, 3
    %v2045 = vsel %vm94, %v2044, 0
    %v2048 = vsel %vm94, %v1979, 0
    %v2051 = vsel %vm94, %v1980, 0
    %v2054 = vsel %vm94, %v1981, 0
    %v2057 = vsel %vm94, %v1982, 0
    %v2060 = vsel %vm94, %v1983, 0
    %v2063 = vsel %vm94, %v1984, 0
    %v2066 = vsel %vm94, %v1985, 0
    %v2069 = vsel %vm94, %v1986, 0
    %v2072 = vsel %vm94, %v1987, 0
    %v2075 = vsel %vm94, %v1988, 0
    %v2078 = vsel %vm94, %v1989, 0
    %v2081 = vsel %vm94, %v1990, 0
    %v2084 = vsel %vm94, %v1991, 0
    %v2087 = vsel %vm94, %v1992, 0
    %v2090 = vsel %vm94, %v1993, 0
    %v2093 = vsel %vm94, %v1994, 0
    %v2096 = vsel %vm94, %v1995, 0
    %v2099 = vsel %vm94, %v1996, 0
    %v2102 = vsel %vm94, %v1997, 0
    %v2105 = vsel %vm94, %v1998, 0
    %v2108 = vsel %vm94, %v1999, 0
    %v2111 = vsel %vm94, %v2000, 0
    %v2114 = vsel %vm94, %v2001, 0
    %v2117 = vsel %vm94, %v2002, 0
    %v2120 = vsel %vm94, %v2003, 0
    %v2123 = vsel %vm94, %v2004, 0
    %v2126 = vsel %vm94, %v2005, 0
    %v2129 = vsel %vm94, %v2006, 0
    %v2132 = vsel %vm94, %v2007, 0
    %v2135 = vsel %vm94, %v2008, 0
    %v2138 = vsel %vm94, %v2009, 0
    %v2141 = vsel %vm94, %v2010, 0
    %v2144 = vsel %vm94, %v2011, 0
    %v2147 = vsel %vm94, %v2012, 0
    %v2150 = vsel %vm94, %v2013, 0
    %v2153 = vsel %vm94, %v2014, 0
    %v2156 = vsel %vm94, %v2015, 0
    %v2159 = vsel %vm94, %v2016, 0
    %v2162 = vsel %vm94, %v2017, 0
    %v2165 = vsel %vm94, %v2018, 0
    %v2168 = vsel %vm94, %v2019, 0
    %v2171 = vsel %vm94, %v2020, 0
    %v2174 = vsel %vm94, %v2021, 0
    %v2177 = vsel %vm94, %v2022, 0
    %v2180 = vsel %vm94, %v2023, 0
    %v2183 = vsel %vm94, %v2024, 0
    %v2186 = vsel %vm94, %v2025, 0
    %v2189 = vsel %vm94, %v2026, 0
    %v2192 = vsel %vm94, %v2027, 0
    %v2195 = vsel %vm94, %v2028, 0
    %v2198 = vsel %vm94, %v2029, 0
    %v2201 = vsel %vm94, %v2030, 0
    %v2204 = vsel %vm94, %v2031, 0
    %v2207 = vsel %vm94, %v2032, 0
    %v2210 = vsel %vm94, %v2033, 0
    %v2213 = vsel %vm94, %v2034, 0
    %v2216 = vsel %vm94, %v2035, 0
    %v2219 = vsel %vm94, %v2036, 0
    %v2222 = vsel %vm94, %v2037, 0
    %v2225 = vsel %vm94, %v2038, 0
    %v2228 = vsel %vm94, %v2039, 0
    %v2231 = vsel %vm94, %v2040, 0
    %v2234 = vsel %vm94, %v2041, 0
    %v2237 = vsel %vm94, %v2042, 0
    %2239 = vmatprep.subr.mxu0 0.0
    %2240 = vmatpush1.xpose.msra.mxu0 %v2093
    %2241 = vmatprep.subr.mxu0 0.0
    %2242 = vmatpush1.xpose.msra.mxu0 %v2090
    %2243 = vmatprep.subr.mxu0 0.0
    %2244 = vmatpush1.xpose.msra.mxu0 %v2087
    %2245 = vmatprep.subr.mxu0 0.0
    %2246 = vmatpush1.xpose.msra.mxu0 %v2084
    %2247 = vmatprep.subr.mxu0 0.0
    %2248 = vmatpush1.xpose.msra.mxu0 %v2081
    %2249 = vmatprep.subr.mxu0 0.0
    %2250 = vmatpush1.xpose.msra.mxu0 %v2078
    %2251 = vmatprep.subr.mxu0 0.0
    %2252 = vmatpush1.xpose.msra.mxu0 %v2075
    %2253 = vmatprep.subr.mxu0 0.0
    %2254 = vmatpush1.xpose.msra.mxu0 %v2072
    %2255 = vmatprep.subr.mxu0 0.0
    %2256 = vmatpush1.xpose.msra.mxu0 %v2069
    %2257 = vmatprep.subr.mxu0 0.0
    %2258 = vmatpush1.xpose.msra.mxu0 %v2066
    %2259 = vmatprep.subr.mxu0 0.0
    %2260 = vmatpush1.xpose.msra.mxu0 %v2063
    %2261 = vmatprep.subr.mxu0 0.0
    %2262 = vmatpush1.xpose.msra.mxu0 %v2060
    %2263 = vmatprep.subr.mxu0 0.0
    %2264 = vmatpush1.xpose.msra.mxu0 %v2057
    %2265 = vmatprep.subr.mxu0 0.0
    %2266 = vmatpush1.xpose.msra.mxu0 %v2054
    %2267 = vmatprep.subr.mxu0 0.0
    %2268 = vmatpush1.xpose.msra.mxu0 %v2051
    %2269 = vmatprep.subr.mxu0 0.0
    %2270 = vmatpush1.xpose.msra.mxu0 %v2048
    %2271 = vmatprep.subr.mxu0 0.0
    %2272 = vmatpush2.xpose.msra.mxu0 %v2141
    %2273 = vmatprep.subr.mxu0 0.0
    %2274 = vmatpush2.xpose.msra.mxu0 %v2138
    %2275 = vmatprep.subr.mxu0 0.0
    %2276 = vmatpush2.xpose.msra.mxu0 %v2135
    %2277 = vmatprep.subr.mxu0 0.0
    %2278 = vmatpush2.xpose.msra.mxu0 %v2132
    %2279 = vmatprep.subr.mxu0 0.0
    %2280 = vmatpush2.xpose.msra.mxu0 %v2129
    %2281 = vmatprep.subr.mxu0 0.0
    %2282 = vmatpush2.xpose.msra.mxu0 %v2126
    %2283 = vmatprep.subr.mxu0 0.0
    %2284 = vmatpush2.xpose.msra.mxu0 %v2123
    %2285 = vmatprep.subr.mxu0 0.0
    %2286 = vmatpush2.xpose.msra.mxu0 %v2120
    %2287 = vmatprep.subr.mxu0 0.0
    %2288 = vmatpush2.xpose.msra.mxu0 %v2117
    %2289 = vmatprep.subr.mxu0 0.0
    %2290 = vmatpush2.xpose.msra.mxu0 %v2114
    %2291 = vmatprep.subr.mxu0 0.0
    %2292 = vmatpush2.xpose.msra.mxu0 %v2111
    %2293 = vmatprep.subr.mxu0 0.0
    %2294 = vmatpush2.xpose.msra.mxu0 %v2108
    %2295 = vmatprep.subr.mxu0 0.0
    %2296 = vmatpush2.xpose.msra.mxu0 %v2105
    %2297 = vmatprep.subr.mxu0 0.0
    %2298 = vmatpush2.xpose.msra.mxu0 %v2102
    %2299 = vmatprep.subr.mxu0 0.0
    %2300 = vmatpush2.xpose.msra.mxu0 %v2099
    %2301 = vmatprep.subr.mxu0 0.0
    %2302 = vmatpush2.xpose.msra.mxu0 %v2096
    %2303 = vmatprep.mubr.f32.mxu0 0.0
    %2304 = vmatmul.mubr.f32.gmra.mxu0 %v2045
    %v2305 = vpop.f32.mrf.mxu0
    %v2306 = vadd.f32 0.0, %v2305
    %v2307 = vpop.f32.mrf.mxu0
    %v2308 = vadd.f32 0.0, %v2307
    %2309 = vdwg.mxu0
    %2310 = vmatprep.subr.mxu0 0.0
    %2311 = vmatpush1.xpose.msra.mxu0 %v2189
    %2312 = vmatprep.subr.mxu0 0.0
    %2313 = vmatpush1.xpose.msra.mxu0 %v2186
    %2314 = vmatprep.subr.mxu0 0.0
    %2315 = vmatpush1.xpose.msra.mxu0 %v2183
    %2316 = vmatprep.subr.mxu0 0.0
    %2317 = vmatpush1.xpose.msra.mxu0 %v2180
    %2318 = vmatprep.subr.mxu0 0.0
    %2319 = vmatpush1.xpose.msra.mxu0 %v2177
    %2320 = vmatprep.subr.mxu0 0.0
    %2321 = vmatpush1.xpose.msra.mxu0 %v2174
    %2322 = vmatprep.subr.mxu0 0.0
    %2323 = vmatpush1.xpose.msra.mxu0 %v2171
    %2324 = vmatprep.subr.mxu0 0.0
    %2325 = vmatpush1.xpose.msra.mxu0 %v2168
    %2326 = vmatprep.subr.mxu0 0.0
    %2327 = vmatpush1.xpose.msra.mxu0 %v2165
    %2328 = vmatprep.subr.mxu0 0.0
    %2329 = vmatpush1.xpose.msra.mxu0 %v2162
    %2330 = vmatprep.subr.mxu0 0.0
    %2331 = vmatpush1.xpose.msra.mxu0 %v2159
    %2332 = vmatprep.subr.mxu0 0.0
    %2333 = vmatpush1.xpose.msra.mxu0 %v2156
    %2334 = vmatprep.subr.mxu0 0.0
    %2335 = vmatpush1.xpose.msra.mxu0 %v2153
    %2336 = vmatprep.subr.mxu0 0.0
    %2337 = vmatpush1.xpose.msra.mxu0 %v2150
    %2338 = vmatprep.subr.mxu0 0.0
    %2339 = vmatpush1.xpose.msra.mxu0 %v2147
    %2340 = vmatprep.subr.mxu0 0.0
    %2341 = vmatpush1.xpose.msra.mxu0 %v2144
    %2342 = vmatprep.subr.mxu0 0.0
    %2343 = vmatpush2.xpose.msra.mxu0 %v2237
    %2344 = vmatprep.subr.mxu0 0.0
    %2345 = vmatpush2.xpose.msra.mxu0 %v2234
    %2346 = vmatprep.subr.mxu0 0.0
    %2347 = vmatpush2.xpose.msra.mxu0 %v2231
    %2348 = vmatprep.subr.mxu0 0.0
    %2349 = vmatpush2.xpose.msra.mxu0 %v2228
    %2350 = vmatprep.subr.mxu0 0.0
    %2351 = vmatpush2.xpose.msra.mxu0 %v2225
    %2352 = vmatprep.subr.mxu0 0.0
    %2353 = vmatpush2.xpose.msra.mxu0 %v2222
    %2354 = vmatprep.subr.mxu0 0.0
    %2355 = vmatpush2.xpose.msra.mxu0 %v2219
    %2356 = vmatprep.subr.mxu0 0.0
    %2357 = vmatpush2.xpose.msra.mxu0 %v2216
    %2358 = vmatprep.subr.mxu0 0.0
    %2359 = vmatpush2.xpose.msra.mxu0 %v2213
    %2360 = vmatprep.subr.mxu0 0.0
    %2361 = vmatpush2.xpose.msra.mxu0 %v2210
    %2362 = vmatprep.subr.mxu0 0.0
    %2363 = vmatpush2.xpose.msra.mxu0 %v2207
    %2364 = vmatprep.subr.mxu0 0.0
    %2365 = vmatpush2.xpose.msra.mxu0 %v2204
    %2366 = vmatprep.subr.mxu0 0.0
    %2367 = vmatpush2.xpose.msra.mxu0 %v2201
    %2368 = vmatprep.subr.mxu0 0.0
    %2369 = vmatpush2.xpose.msra.mxu0 %v2198
    %2370 = vmatprep.subr.mxu0 0.0
    %2371 = vmatpush2.xpose.msra.mxu0 %v2195
    %2372 = vmatprep.subr.mxu0 0.0
    %2373 = vmatpush2.xpose.msra.mxu0 %v2192
    %2374 = vmatprep.mubr.f32.mxu0 0.0
    %2375 = vmatmul.mubr.f32.gmra.mxu0 %v2045
    %v2376 = vpop.f32.mrf.mxu0
    %v2377 = vadd.f32 0.0, %v2376
    %v2378 = vpop.f32.mrf.mxu0
    %v2379 = vadd.f32 0.0, %v2378
    %2380 = vdwg.mxu0
    %v2381 = vxor.u32 %v2306, 2147483648
    %v2382 = vxor.u32 %v2308, 2147483648
    %v2383 = vxor.u32 %v2377, 2147483648
    %v2384 = vxor.u32 %v2379, 2147483648
    %v2385 = vmul.f32 %v2381, 1.442695
    %v2386 = vpow.pop %v2385
    %v2387 = vmul.f32 %v2382, 1.442695
    %v2388 = vpow.pop %v2387
    %v2389 = vmul.f32 %v2383, 1.442695
    %v2390 = vpow.pop %v2389
    %v2391 = vmul.f32 %v2384, 1.442695
    %v2392 = vpow.pop %v2391
    %v2393 = vadd.f32 %v2386, 1.0
    %v2394 = vadd.f32 %v2388, 1.0
    %v2395 = vadd.f32 %v2390, 1.0
    %v2396 = vadd.f32 %v2392, 1.0
    %v2397 = vrcp.pop %v2393
    %v2398 = vmul.f32 1.0, %v2397
    %v2399 = vrcp.pop %v2394
    %v2400 = vmul.f32 1.0, %v2399
    %v2401 = vrcp.pop %v2395
    %v2402 = vmul.f32 1.0, %v2401
    %v2403 = vrcp.pop %v2396
    %v2404 = vmul.f32 1.0, %v2403
    %v2409 = vcombine.low %v2398, %v2400
    %v2410 = vcombine.low %v2402, %v2404
    %v2412 = vunpack.c.l.s4 1966171168
    %v2413 = vunpack.c.0.s8 %v2412
    %v2414 = vlaneseq
    %v2415 = vshrl.u32 %v2414, 7
    %v2416 = vsub.s32 %v2413, %v2415
    %v2417 = vrot.slane %v2409, %v2416
    %v2419 = vunpack.c.l.s4 1966171168
    %v2420 = vunpack.c.0.s8 %v2419
    %v2421 = vlaneseq
    %v2422 = vshrl.u32 %v2421, 7
    %v2423 = vsub.s32 %v2420, %v2422
    %v2424 = vrot.slane %v2410, %v2423
    %v2425 = vcombine.low %v2417, %v2424
    %v2427 = vunpack.c.l.s4 1966171168
    %v2428 = vunpack.c.0.s8 %v2427
    %v2429 = vlaneseq
    %v2430 = vshrl.u32 %v2429, 7
    %v2431 = vsub.s32 %v2428, %v2430
    %v2432 = vrot.slane %v2425, %v2431
    %v2434 = vlaneseq
    %vm2435 = vcmp.ge.s32.totalorder %v2434, 0
    %vm2436 = vcmp.lt.s32.totalorder %v2434, 512
    %vm2437 = vmand %vm2435, %vm2436
    %2438 = vst.msk [vmem:[#allocation2] sm:$0xf] %vm2437, %v2432
    // Predicated region
    $region22: #{mlp_forward.1} parent=1 // pred_check
      _
    $region23: #{mlp_forward.1} parent=1 // pred_check_branch
      %2440 = sbr.rel (0) target = $region25
    $region24: #{mlp_forward.1} parent=1 // pred_region
      %s2442 = ssub.s32 64, 64
      %2443 = vsyncadd [#allocation3], %s2442
      %s2445 = sshll.u32 [#allocation2], 4
      %s2446 = int_to_ptr.vmem [resolvable:$true] %s2445
      %2448 = dma.vmem_to_hbm [thread:$0]  %s2446, 64, %s5, [#allocation3]
    $region25: #{mlp_forward.1} parent=1 // pred_fallthru
      _
    // Predicated region
    $region26: #{mlp_forward.1} parent=1 // pred_check
      _
    $region27: #{mlp_forward.1} parent=1 // pred_check_branch
      %2450 = sbr.rel (0) target = $region29
    $region28: #{mlp_forward.1} parent=1 // pred_region
      %2451 = dma.done [#allocation3], 64
    $region29: #{mlp_forward.1} parent=1 // pred_fallthru
      _
    %2452 = vsyncpa [#allocation3], 1

</llo_original>
